<compile_context>
chip_gen: v6e
topology: v6e:2x2x1
jax: 0.10.0
libtpu: 0.0.40
codegen_flags: <defaults>
</compile_context>

<pallas_src>
import jax
import jax.numpy as jnp
from jax.experimental import pallas as pl
from jax.experimental.pallas import tpu as pltpu


def _context_attention_kernel(x_ref, wt_ref, b_ref, c_ref, e_ref, out_ref):
    # x_ref  : (BB, T, size)  bf16  block of batch elements
    # wt_ref : (size, size)   bf16  Linear weight, pre-transposed (y = x @ wt + b)
    # b_ref  : (1, size)      f32   Linear bias
    # c_ref  : (size, H)      bf16  block-diagonal context-vector matrix
    # e_ref  : (H, size)      bf16  head -> feature 0/1 expansion matrix
    # out_ref: (BB, size)     f32   lane-dense output slab
    BB, T, size = x_ref.shape
    H = c_ref.shape[1]

    x = x_ref[...]                                            # (BB, T, size) bf16
    x2 = x.reshape(BB * T, size)                              # leading-dim collapse

    # attention = tanh(Linear(x)); bf16 MXU operands, f32 accumulate, f32 tanh.
    att = jnp.tanh(
        jnp.dot(x2, wt_ref[...], preferred_element_type=jnp.float32)
        + b_ref[...]
    ).astype(jnp.bfloat16)                                    # (BB*T, size) bf16

    # Per-head similarity with the context vector as ONE matmul against the
    # block-diagonal matrix C (replaces H lane-slices + XLU reduces + concat).
    sim = jnp.dot(att, c_ref[...],
                  preferred_element_type=jnp.float32)         # (BB*T, H) f32
    sim = sim.reshape(BB, T, H)

    # Pad mask from the resident x block (padded timesteps are exactly-zero
    # rows, so the bf16 row-sum test matches the f32 semantics of the module).
    pad = jnp.sum(x.astype(jnp.float32), axis=-1, keepdims=True) == 0.0
    sim = jnp.where(pad, jnp.float32(-1e10), sim)             # (BB, T, H) f32

    # Softmax over the sequence axis with T on lanes: transpose the small sim
    # tensor (XLU has slack), keep max/denom/reciprocal in f32.
    sim_t = jnp.transpose(sim, (0, 2, 1))                     # (BB, H, T) f32
    sim_t = sim_t - jnp.max(sim_t, axis=-1, keepdims=True)
    e = jnp.exp(sim_t)
    denom = jnp.sum(e, axis=-1, keepdims=True)                # (BB, H, 1) f32
    wgt_t = e * pl.reciprocal(denom, approx=True)             # (BB, H, T) f32
    wgt = jnp.transpose(wgt_t, (0, 2, 1)).reshape(BB * T, H)  # (BB*T, H)

    # Broadcast head weights back to feature width with a tiny MXU matmul
    # against the 0/1 expansion matrix E.
    wgt_full = jnp.dot(wgt.astype(jnp.bfloat16), e_ref[...],
                       preferred_element_type=jnp.float32)    # (BB*T, size)
    wgt_full = wgt_full.reshape(BB, T, size).astype(jnp.bfloat16)

    # Weighted sum over T: bf16 multiply, f32 accumulation.
    out = jnp.sum((x * wgt_full).astype(jnp.float32), axis=1)  # (BB, size) f32
    out_ref[...] = out.astype(out_ref.dtype)


def _pick_block_b(B, T, size, *, vmem_budget_bytes=24 << 20):
    """Batch block size: multiple of 8, VMEM-budgeted, MXU-M pushed toward 512,
    but capped so there are >= 2 grid steps whenever B allows (v7x megacore)."""
    # Rough per-batch-row working set of one grid step:
    #   bf16 x block (double-buffered) + bf16 att + bf16 wgt_full
    #   + f32 Linear accumulator + small f32 softmax temporaries.
    bytes_per_row = T * size * (2 * 2 + 2 + 2 + 4) + T * 64
    cap = max(8, vmem_budget_bytes // max(bytes_per_row, 1))
    bb = 8
    while (bb * 2 <= cap) and (bb * T < 512) and (bb * 2 <= max(8, B // 2)):
        bb *= 2
    return int(bb)


def context_attention(x, w, b, cv, num_head, *, block_b=None):
    """x: (B, T, size) f32; w: (size, size) PyTorch Linear weight; b: (size,);
    cv: (num_head, head_size, 1) context vector.  Returns (B, size) f32."""
    B, T, size = x.shape
    assert size % num_head == 0
    head_size = size // num_head
    assert head_size != 1, "head_size == 1 branch not implemented in kernel"

    if block_b is None:
        block_b = _pick_block_b(B, T, size)

    # MXU operands in bf16; bias and all transcendental / softmax math stays f32.
    wt = w.T.astype(jnp.bfloat16)                            # (in, out)
    bias = b.reshape(1, size).astype(jnp.float32)

    # E (H, size): E[h, h*Hd:(h+1)*Hd] = 1
    # C (size, H): block-diagonal, C[h*Hd + d, h] = cv[h, d]
    E = jnp.repeat(jnp.eye(num_head, dtype=jnp.float32), head_size, axis=1)
    C = (E.T * cv.reshape(size)[:, None]).astype(jnp.bfloat16)
    E = E.astype(jnp.bfloat16)

    # Stream x in bf16; pad the batch up to a multiple of the block size
    # (padded rows are all-zero -> fully masked -> harmless, sliced off below).
    x_bf = x.astype(jnp.bfloat16)
    Bp = ((B + block_b - 1) // block_b) * block_b
    if Bp != B:
        x_bf = jnp.pad(x_bf, ((0, Bp - B), (0, 0), (0, 0)))

    out = pl.pallas_call(
        _context_attention_kernel,
        out_shape=jax.ShapeDtypeStruct((Bp, size), jnp.float32),
        grid_spec=pltpu.PrefetchScalarGridSpec(
            num_scalar_prefetch=0,
            grid=(Bp // block_b,),
            in_specs=[
                pl.BlockSpec((block_b, T, size), lambda bi: (bi, 0, 0)),
                pl.BlockSpec((size, size), lambda bi: (0, 0)),
                pl.BlockSpec((1, size), lambda bi: (0, 0)),
                pl.BlockSpec((size, num_head), lambda bi: (0, 0)),
                pl.BlockSpec((num_head, size), lambda bi: (0, 0)),
            ],
            out_specs=pl.BlockSpec((block_b, size), lambda bi: (bi, 0)),
        ),
        compiler_params=pltpu.CompilerParams(
            # Batch axis is embarrassingly parallel -> shards across both TCs
            # on v7x (grid kept >= 2 whenever B allows); neutral on v5e/v6e.
            dimension_semantics=("parallel",),
            vmem_limit_bytes=48 * 1024 * 1024,
        ),
    )(x_bf, wt, bias, C, E)
    return out[:B] if Bp != B else out


def context_attention_ref(x, w, b, cv, num_head):
    """Pure-JAX f32 reference replicating the PyTorch forward (head_size != 1)."""
    B, T, size = x.shape
    Hd = size // num_head
    att = jnp.tanh(x @ w.T + b)                                   # (B,T,size)
    att_h = att.reshape(B, T, num_head, Hd)
    sim = jnp.einsum("bthd,hd->bth", att_h, cv.reshape(num_head, Hd))
    pad = (x.sum(-1) == 0)
    sim = jnp.where(pad[..., None], -1e10, sim)
    wgt = jax.nn.softmax(sim, axis=1)                             # over T
    x_h = x.reshape(B, T, num_head, Hd)
    weighted = x_h * wgt[..., None]
    return weighted.reshape(B, T, size).sum(axis=1)


if __name__ == "__main__":
    B, T, size, num_head = 16, 16, 64, 4
    head_size = size // num_head

    key = jax.random.PRNGKey(0)
    kx, kw, kb, kc = jax.random.split(key, 4)

    x = jax.random.normal(kx, (B, T, size), dtype=jnp.float32)
    # Zero out trailing timesteps of a couple of batch elements to exercise
    # the padding mask.
    x = x.at[0, -3:, :].set(0.0)
    x = x.at[5, -1:, :].set(0.0)

    bound = 1.0 / jnp.sqrt(jnp.float32(size))
    w = jax.random.uniform(kw, (size, size), jnp.float32, -bound, bound)
    b = jax.random.uniform(kb, (size,), jnp.float32, -bound, bound)
    cv = jax.random.uniform(kc, (num_head, head_size, 1), jnp.float32, -1.0, 1.0)

    out = context_attention(x, w, b, cv, num_head)
    out = jax.block_until_ready(out)

    ref = context_attention_ref(x, w, b, cv, num_head)
    assert out.shape == (B, size)
    assert out.dtype == jnp.float32
    # bf16 x / bf16 matmul operands + approx reciprocal => compare against the
    # f32 reference with a correspondingly relaxed tolerance.
    err = float(jnp.max(jnp.abs(out - ref)))
    assert jnp.allclose(out, ref, atol=3e-2, rtol=3e-2), f"max err {err}"

    print("KERNEL_OK")
</pallas_src>

<mosaic_0001>
module attributes {stable_mosaic.version = 11 : i64} {
  func.func @_context_attention_kernel(%arg0: i32, %arg1: memref<8x16x64xbf16, #tpu.memory_space<vmem>>, %arg2: memref<64x64xbf16, #tpu.memory_space<vmem>>, %arg3: memref<1x64xf32, #tpu.memory_space<vmem>>, %arg4: memref<64x4xbf16, #tpu.memory_space<vmem>>, %arg5: memref<4x64xbf16, #tpu.memory_space<vmem>>, %arg6: memref<8x64xf32, #tpu.memory_space<vmem>>) attributes {dimension_semantics = [#tpu.dimension_semantics<parallel>], iteration_bounds = array<i64: 2>, scalar_prefetch = 0 : i64, scratch_operands = 0 : i64, tpu.core_type = #tpu.core_type<tc>, window_params = [{transform_indices = @transform_0, window_bounds = array<i64: 8, 16, 64>}, {pipeline_mode = #tpu.pipeline_mode<synchronous>, transform_indices = @transform_1, window_bounds = array<i64: 64, 64>}, {pipeline_mode = #tpu.pipeline_mode<synchronous>, transform_indices = @transform_2, window_bounds = array<i64: 1, 64>}, {pipeline_mode = #tpu.pipeline_mode<synchronous>, transform_indices = @transform_3, window_bounds = array<i64: 64, 4>}, {pipeline_mode = #tpu.pipeline_mode<synchronous>, transform_indices = @transform_4, window_bounds = array<i64: 4, 64>}, {transform_indices = @transform_5, window_bounds = array<i64: 8, 64>}]} {
    %c0 = arith.constant 0 : index
    %c0_0 = arith.constant 0 : index
    %c0_1 = arith.constant 0 : index
    %0 = vector.load %arg1[%c0, %c0_0, %c0_1] : memref<8x16x64xbf16, #tpu.memory_space<vmem>>, vector<8x16x64xbf16>
    %1 = vector.shape_cast %0 : vector<8x16x64xbf16> to vector<128x64xbf16>
    %c0_2 = arith.constant 0 : index
    %c0_3 = arith.constant 0 : index
    %2 = vector.load %arg2[%c0_2, %c0_3] : memref<64x64xbf16, #tpu.memory_space<vmem>>, vector<64x64xbf16>
    %cst = arith.constant dense<0.000000e+00> : vector<128x64xf32>
    %3 = tpu.matmul %1, %2, %cst {dimension_numbers = #tpu.dot_dimension_numbers<[1], [0], [0], [1], [0, 0, 1, 1], [], []>} : vector<128x64xbf16>, vector<64x64xbf16>, vector<128x64xf32> -> vector<128x64xf32>
    %c0_4 = arith.constant 0 : index
    %c0_5 = arith.constant 0 : index
    %4 = vector.load %arg3[%c0_4, %c0_5] : memref<1x64xf32, #tpu.memory_space<vmem>>, vector<1x64xf32>
    %5 = vector.broadcast %4 : vector<1x64xf32> to vector<128x64xf32>
    %6 = arith.addf %3, %5 : vector<128x64xf32>
    %7 = math.tanh %6 : vector<128x64xf32>
    %8 = arith.truncf %7 : vector<128x64xf32> to vector<128x64xbf16>
    %c0_6 = arith.constant 0 : index
    %c0_7 = arith.constant 0 : index
    %9 = vector.load %arg4[%c0_6, %c0_7] : memref<64x4xbf16, #tpu.memory_space<vmem>>, vector<64x4xbf16>
    %cst_8 = arith.constant dense<0.000000e+00> : vector<128x4xf32>
    %10 = tpu.matmul %8, %9, %cst_8 {dimension_numbers = #tpu.dot_dimension_numbers<[1], [0], [0], [1], [0, 0, 1, 1], [], []>} : vector<128x64xbf16>, vector<64x4xbf16>, vector<128x4xf32> -> vector<128x4xf32>
    %11 = vector.shape_cast %10 : vector<128x4xf32> to vector<8x16x4xf32>
    %12 = arith.extf %0 : vector<8x16x64xbf16> to vector<8x16x64xf32>
    %cst_9 = arith.constant dense<0.000000e+00> : vector<8x16xf32>
    %13 = vector.multi_reduction <add>, %12, %cst_9 [2] : vector<8x16x64xf32> to vector<8x16xf32>
    %14 = vector.shape_cast %13 : vector<8x16xf32> to vector<8x16x1xf32>
    %cst_10 = arith.constant 0.000000e+00 : f32
    %15 = vector.broadcast %cst_10 : f32 to vector<8x16x1xf32>
    %16 = arith.cmpf oeq, %14, %15 : vector<8x16x1xf32>
    %cst_11 = arith.constant -1.000000e+10 : f32
    %17 = vector.shape_cast %16 : vector<8x16x1xi1> to vector<8x16x1xi1>
    %18 = vector.broadcast %17 : vector<8x16x1xi1> to vector<8x16x4xi1>
    %19 = vector.broadcast %cst_11 : f32 to vector<8x16x4xf32>
    %20 = arith.select %18, %19, %11 : vector<8x16x4xi1>, vector<8x16x4xf32>
    %21 = tpu.transpose %20, [0, 2, 1] : vector<8x16x4xf32> -> vector<8x4x16xf32>
    %cst_12 = arith.constant dense<0xFF800000> : vector<8x4xf32>
    %22 = vector.multi_reduction <maximumf>, %21, %cst_12 [2] : vector<8x4x16xf32> to vector<8x4xf32>
    %23 = vector.shape_cast %22 : vector<8x4xf32> to vector<8x4x1xf32>
    %24 = vector.broadcast %23 : vector<8x4x1xf32> to vector<8x4x16xf32>
    %25 = arith.subf %21, %24 : vector<8x4x16xf32>
    %26 = math.exp %25 : vector<8x4x16xf32>
    %cst_13 = arith.constant dense<0.000000e+00> : vector<8x4xf32>
    %27 = vector.multi_reduction <add>, %26, %cst_13 [2] : vector<8x4x16xf32> to vector<8x4xf32>
    %28 = vector.shape_cast %27 : vector<8x4xf32> to vector<8x4x1xf32>
    %29 = tpu.reciprocal %28 {approx = true} : vector<8x4x1xf32> -> vector<8x4x1xf32>
    %30 = vector.broadcast %29 : vector<8x4x1xf32> to vector<8x4x16xf32>
    %31 = arith.mulf %26, %30 : vector<8x4x16xf32>
    %32 = tpu.transpose %31, [0, 2, 1] : vector<8x4x16xf32> -> vector<8x16x4xf32>
    %33 = vector.shape_cast %32 : vector<8x16x4xf32> to vector<128x4xf32>
    %34 = arith.truncf %33 : vector<128x4xf32> to vector<128x4xbf16>
    %c0_14 = arith.constant 0 : index
    %c0_15 = arith.constant 0 : index
    %35 = vector.load %arg5[%c0_14, %c0_15] : memref<4x64xbf16, #tpu.memory_space<vmem>>, vector<4x64xbf16>
    %cst_16 = arith.constant dense<0.000000e+00> : vector<128x64xf32>
    %36 = tpu.matmul %34, %35, %cst_16 {dimension_numbers = #tpu.dot_dimension_numbers<[1], [0], [0], [1], [0, 0, 1, 1], [], []>} : vector<128x4xbf16>, vector<4x64xbf16>, vector<128x64xf32> -> vector<128x64xf32>
    %37 = vector.shape_cast %36 : vector<128x64xf32> to vector<8x16x64xf32>
    %38 = arith.truncf %37 : vector<8x16x64xf32> to vector<8x16x64xbf16>
    %39 = arith.mulf %0, %38 : vector<8x16x64xbf16>
    %40 = arith.extf %39 : vector<8x16x64xbf16> to vector<8x16x64xf32>
    %cst_17 = arith.constant dense<0.000000e+00> : vector<8x64xf32>
    %41 = vector.multi_reduction <add>, %40, %cst_17 [1] : vector<8x16x64xf32> to vector<8x64xf32>
    %c0_18 = arith.constant 0 : index
    %c0_19 = arith.constant 0 : index
    %42 = vector.load %arg6[%c0_18, %c0_19] : memref<8x64xf32, #tpu.memory_space<vmem>>, vector<8x64xf32>
    tpu.vector_store %arg6[%c0_18, %c0_19], %41 {strides = array<i32>} : memref<8x64xf32, #tpu.memory_space<vmem>>, vector<8x64xf32>,
    return
  }
  func.func @transform_0(%arg0: i32) -> (i32, i32, i32) {
    %c0_i32 = arith.constant 0 : i32
    %c0_i32_0 = arith.constant 0 : i32
    %c0_i32_1 = arith.constant 0 : i32
    return %arg0, %c0_i32, %c0_i32_0 : i32, i32, i32
  }
  func.func @transform_1(%arg0: i32) -> (i32, i32) {
    %c0_i32 = arith.constant 0 : i32
    %c0_i32_0 = arith.constant 0 : i32
    %c0_i32_1 = arith.constant 0 : i32
    return %c0_i32, %c0_i32_0 : i32, i32
  }
  func.func @transform_2(%arg0: i32) -> (i32, i32) {
    %c0_i32 = arith.constant 0 : i32
    %c0_i32_0 = arith.constant 0 : i32
    %c0_i32_1 = arith.constant 0 : i32
    return %c0_i32, %c0_i32_0 : i32, i32
  }
  func.func @transform_3(%arg0: i32) -> (i32, i32) {
    %c0_i32 = arith.constant 0 : i32
    %c0_i32_0 = arith.constant 0 : i32
    %c0_i32_1 = arith.constant 0 : i32
    return %c0_i32, %c0_i32_0 : i32, i32
  }
  func.func @transform_4(%arg0: i32) -> (i32, i32) {
    %c0_i32 = arith.constant 0 : i32
    %c0_i32_0 = arith.constant 0 : i32
    %c0_i32_1 = arith.constant 0 : i32
    return %c0_i32, %c0_i32_0 : i32, i32
  }
  func.func @transform_5(%arg0: i32) -> (i32, i32) {
    %c0_i32 = arith.constant 0 : i32
    %c0_i32_0 = arith.constant 0 : i32
    return %arg0, %c0_i32 : i32, i32
  }
}

</mosaic_0001>

<llo_original>
// kernel: tpu_custom_call.1
$region0: #{tpu_custom_call.1}
  #allocation0 [shape = 'u32[]', space=smem, size = 0x4, offset = 0x4, fixed_abs, tag = 'smem constant byte address 0x4 - core index']
  #allocation1 [shape = 'u32[144,128]{1,0:T(1,128)}', space=vmem, size = 0x12000, scoped, tag = 'internal scratch']
  %s0 = inlined_call_operand.hbm [shape: bf16[16,16,64], index: 0, kind: input, shape index: {}]
  %s1 = inlined_call_operand.vmem [shape: bf16[64,64], index: 1, kind: input, shape index: {}]
  %s2 = inlined_call_operand.vmem [shape: f32[1,64], index: 2, kind: input, shape index: {}]
  %s3 = inlined_call_operand.vmem [shape: bf16[64,4], index: 3, kind: input, shape index: {}]
  %s4 = inlined_call_operand.vmem [shape: bf16[4,64], index: 4, kind: input, shape index: {}]
  %s5 = inlined_call_operand.hbm [shape: f32[16,64], index: 5, kind: output, shape index: {}]
  %s6 = sld [smem:[#allocation0]]
  $region57: #{tpu_custom_call.1} parent=0
    _
  %s8 = ssub.s32 1, %s6
  %s9 = scalar_select 0, %s8, %s6
  $region1: #{tpu_custom_call.1} parent=0
    #allocation2 [shape = 'u8[65536]{0}', space=vmem, size = 0x10000, scoped, tag = 'input window, operand 0']
    #allocation3 [shape = 's32[2]{0}', space=sflag, size = 0x8, scoped, tag = 'scoped memory for tpu_custom_call.1']
    #allocation4 [shape = 's32[2]{0}', space=sflag, size = 0x8, scoped, tag = 'scoped memory for tpu_custom_call.1']
    #allocation5 [shape = 'u8[8192]{0}', space=vmem, size = 0x2000, scoped, tag = 'output window, operand 0']
    %10 = vsyncpa [#allocation3], 0
    %s11 = scalar_lea.sflag [#allocation3], 1
    %12 = vsyncpa %s11, 0
    %13 = vsyncpa [#allocation4], 0
    %s14 = scalar_lea.sflag [#allocation4], 1
    %15 = vsyncpa %s14, 0
    loop: start=0, step=1, limit=4
    $region2: #{tpu_custom_call.1} parent=1 // loop_pre_header
      _
    $region3: #{tpu_custom_call.1} parent=1 // loop_header
      %s17 = sphi 0, %s21
      %p18 = scmp.ge.s32.totalorder %s17, 4
      %s27 = sphi 0, %s29
      %s30 = sphi 0, %s27
      %s31 = sphi 0, %s30
      %s47 = sphi 0, %s31
      %s51 = sphi 0, %s51
      %s53 = sphi 0, %s51
      %s54 = sphi 0, %s53
      %s68 = sphi 0, %s54
      %s72 = sphi 0, %s72
      %s74 = sphi 0, %s72
      %s75 = sphi 0, %s74
      %s89 = sphi 0, %s75
      %s93 = sphi 0, %s93
      %s95 = sphi 0, %s93
      %s96 = sphi 0, %s95
      %s110 = sphi 0, %s96
      %s114 = sphi 0, %s114
      %s116 = sphi 0, %s114
      %s117 = sphi 0, %s116
      %s131 = sphi 0, %s117
      %s137 = sphi 0, %s139
      %s140 = sphi 0, %s137
      %s141 = sphi 0, %s140
      %s157 = sphi 0, %s141
    $region4: #{tpu_custom_call.1} parent=1 // loop_header_branch
      %20 = sbr.rel (%p18) target = $region8
    $region5: #{tpu_custom_call.1} parent=1 // loop_body
      %s22 = ssub.s32 %s17, 1
      %s23 = ssub.s32 %s17, 2
      %s24 = sadd.s32 %s17, 1
      %s25 = ssub.s32 %s17, %s24
      %p26 = scmp.eq.s32.totalorder %s25, 0
      %s28 = sadd.s32 %s27, 1
      %s29 = scalar_select %p26, %s27, %s28
      %p32 = pneg %p26
      %p33 = scmp.eq.s32.totalorder %s17, 1
      %p34 = por %p32, %p33
      %p35 = scmp.ne.s32.totalorder %s27, %s30
      %p36 = scmp.eq.s32.totalorder %s17, 0
      %p37 = por %p35, %p36
      %p38 = scmp.ne.s32.totalorder %s27, %s30
      %p39 = scmp.eq.s32.totalorder %s22, 1
      %p40 = por %p38, %p39
      %p41 = scmp.ne.s32.totalorder %s30, %s31
      %p42 = scmp.eq.s32.totalorder %s22, 0
      %p43 = por %p41, %p42
      %p44 = scmp.ne.s32.totalorder %s30, %s31
      %p45 = scmp.eq.s32.totalorder %s23, 1
      %p46 = por %p44, %p45
      %p48 = scmp.ne.s32.totalorder %s31, %s47
      %p49 = scmp.eq.s32.totalorder %s23, 0
      %p50 = por %p48, %p49
      %s52 = sadd.s32 %s51, 1
      %p55 = scmp.eq.s32.totalorder %s17, 1
      %p56 = scmp.ne.s32.totalorder %s51, %s53
      %p57 = scmp.eq.s32.totalorder %s17, 0
      %p58 = por %p56, %p57
      %p59 = scmp.ne.s32.totalorder %s51, %s53
      %p60 = scmp.eq.s32.totalorder %s22, 1
      %p61 = por %p59, %p60
      %p62 = scmp.ne.s32.totalorder %s53, %s54
      %p63 = scmp.eq.s32.totalorder %s22, 0
      %p64 = por %p62, %p63
      %p65 = scmp.ne.s32.totalorder %s53, %s54
      %p66 = scmp.eq.s32.totalorder %s23, 1
      %p67 = por %p65, %p66
      %p69 = scmp.ne.s32.totalorder %s54, %s68
      %p70 = scmp.eq.s32.totalorder %s23, 0
      %p71 = por %p69, %p70
      %s73 = sadd.s32 %s72, 1
      %p76 = scmp.eq.s32.totalorder %s17, 1
      %p77 = scmp.ne.s32.totalorder %s72, %s74
      %p78 = scmp.eq.s32.totalorder %s17, 0
      %p79 = por %p77, %p78
      %p80 = scmp.ne.s32.totalorder %s72, %s74
      %p81 = scmp.eq.s32.totalorder %s22, 1
      %p82 = por %p80, %p81
      %p83 = scmp.ne.s32.totalorder %s74, %s75
      %p84 = scmp.eq.s32.totalorder %s22, 0
      %p85 = por %p83, %p84
      %p86 = scmp.ne.s32.totalorder %s74, %s75
      %p87 = scmp.eq.s32.totalorder %s23, 1
      %p88 = por %p86, %p87
      %p90 = scmp.ne.s32.totalorder %s75, %s89
      %p91 = scmp.eq.s32.totalorder %s23, 0
      %p92 = por %p90, %p91
      %s94 = sadd.s32 %s93, 1
      %p97 = scmp.eq.s32.totalorder %s17, 1
      %p98 = scmp.ne.s32.totalorder %s93, %s95
      %p99 = scmp.eq.s32.totalorder %s17, 0
      %p100 = por %p98, %p99
      %p101 = scmp.ne.s32.totalorder %s93, %s95
      %p102 = scmp.eq.s32.totalorder %s22, 1
      %p103 = por %p101, %p102
      %p104 = scmp.ne.s32.totalorder %s95, %s96
      %p105 = scmp.eq.s32.totalorder %s22, 0
      %p106 = por %p104, %p105
      %p107 = scmp.ne.s32.totalorder %s95, %s96
      %p108 = scmp.eq.s32.totalorder %s23, 1
      %p109 = por %p107, %p108
      %p111 = scmp.ne.s32.totalorder %s96, %s110
      %p112 = scmp.eq.s32.totalorder %s23, 0
      %p113 = por %p111, %p112
      %s115 = sadd.s32 %s114, 1
      %p118 = scmp.eq.s32.totalorder %s17, 1
      %p119 = scmp.ne.s32.totalorder %s114, %s116
      %p120 = scmp.eq.s32.totalorder %s17, 0
      %p121 = por %p119, %p120
      %p122 = scmp.ne.s32.totalorder %s114, %s116
      %p123 = scmp.eq.s32.totalorder %s22, 1
      %p124 = por %p122, %p123
      %p125 = scmp.ne.s32.totalorder %s116, %s117
      %p126 = scmp.eq.s32.totalorder %s22, 0
      %p127 = por %p125, %p126
      %p128 = scmp.ne.s32.totalorder %s116, %s117
      %p129 = scmp.eq.s32.totalorder %s23, 1
      %p130 = por %p128, %p129
      %p132 = scmp.ne.s32.totalorder %s117, %s131
      %p133 = scmp.eq.s32.totalorder %s23, 0
      %p134 = por %p132, %p133
      %s135 = ssub.s32 %s17, %s24
      %p136 = scmp.eq.s32.totalorder %s135, 0
      %s138 = sadd.s32 %s137, 1
      %s139 = scalar_select %p136, %s137, %s138
      %p142 = pneg %p136
      %p143 = scmp.eq.s32.totalorder %s17, 1
      %p144 = por %p142, %p143
      %p145 = scmp.ne.s32.totalorder %s137, %s140
      %p146 = scmp.eq.s32.totalorder %s17, 0
      %p147 = por %p145, %p146
      %p148 = scmp.ne.s32.totalorder %s137, %s140
      %p149 = scmp.eq.s32.totalorder %s22, 1
      %p150 = por %p148, %p149
      %p151 = scmp.ne.s32.totalorder %s140, %s141
      %p152 = scmp.eq.s32.totalorder %s22, 0
      %p153 = por %p151, %p152
      %p154 = scmp.ne.s32.totalorder %s140, %s141
      %p155 = scmp.eq.s32.totalorder %s23, 1
      %p156 = por %p154, %p155
      %p158 = scmp.ne.s32.totalorder %s141, %s157
      %p159 = scmp.eq.s32.totalorder %s23, 0
      %p160 = por %p158, %p159
      %p161 = scmp.le.s32.totalorder 1, %s17
      %p162 = scmp.lt.s32.totalorder %s17, 3
      %p163 = pnand %p161, %p162
      %p164 = pneg %p163
      // Predicated region
      $region9: #{tpu_custom_call.1} parent=5 // pred_check
        _
      $region10: #{tpu_custom_call.1} parent=5 // pred_check_branch
        %166 = sbr.rel (%p163) target = $region12
      $region11: #{tpu_custom_call.1} parent=5 // pred_region
        %s167 = ssub.s32 %s17, 1
        // Predicated region
        $region13: #{tpu_custom_call.1} parent=11 // pred_check
          %p168 = pneg %p64
        $region14: #{tpu_custom_call.1} parent=11 // pred_check_branch
          %170 = sbr.rel (%p168) target = $region16
        $region15: #{tpu_custom_call.1} parent=11 // pred_region
          _
        $region16: #{tpu_custom_call.1} parent=11 // pred_fallthru
          _
        // Predicated region
        $region17: #{tpu_custom_call.1} parent=11 // pred_check
          %p171 = pneg %p85
        $region18: #{tpu_custom_call.1} parent=11 // pred_check_branch
          %173 = sbr.rel (%p171) target = $region20
        $region19: #{tpu_custom_call.1} parent=11 // pred_region
          _
        $region20: #{tpu_custom_call.1} parent=11 // pred_fallthru
          _
        // Predicated region
        $region21: #{tpu_custom_call.1} parent=11 // pred_check
          %p174 = pneg %p106
        $region22: #{tpu_custom_call.1} parent=11 // pred_check_branch
          %176 = sbr.rel (%p174) target = $region24
        $region23: #{tpu_custom_call.1} parent=11 // pred_region
          _
        $region24: #{tpu_custom_call.1} parent=11 // pred_fallthru
          _
        // Predicated region
        $region25: #{tpu_custom_call.1} parent=11 // pred_check
          %p177 = pneg %p127
        $region26: #{tpu_custom_call.1} parent=11 // pred_check_branch
          %179 = sbr.rel (%p177) target = $region28
        $region27: #{tpu_custom_call.1} parent=11 // pred_region
          _
        $region28: #{tpu_custom_call.1} parent=11 // pred_fallthru
          _
      $region12: #{tpu_custom_call.1} parent=5 // pred_fallthru
        _
      %p180 = scmp.lt.s32.totalorder %s17, 2
      // Predicated region
      $region29: #{tpu_custom_call.1} parent=5 // pred_check
        %p181 = pneg %p180
      $region30: #{tpu_custom_call.1} parent=5 // pred_check_branch
        %183 = sbr.rel (%p181) target = $region32
      $region31: #{tpu_custom_call.1} parent=5 // pred_region
        // Predicated region
        $region33: #{tpu_custom_call.1} parent=31 // pred_check
          %p184 = pneg %p37
        $region34: #{tpu_custom_call.1} parent=31 // pred_check_branch
          %186 = sbr.rel (%p184) target = $region36
        $region35: #{tpu_custom_call.1} parent=31 // pred_region
          %s187 = sand.u32 %s27, 1
          %s188 = scalar_lea.sflag [#allocation3], %s187
          %s189 = sand.u32 %s27, 1
          %s190 = smul.addr %s189, 64
          %s191 = scalar_lea.vmem [#allocation2], %s190
          %s192 = smul.u32 8, %s17
          %s194 = ssub.s32 1024, 1024
          %195 = vsyncadd %s188, %s194
          %s196 = smul.addr %s192, 2
          %s197 = smul.addr %s196, 64
          %s198 = scalar_lea.hbm %s0, %s197
          %s199 = sshll.u32 %s191, 4
          %s200 = int_to_ptr.vmem [resolvable:$true] %s199
          %205 = dma.hbm_to_vmem [thread:$0]  %s198, 1024, %s200, %s188, 64, 64, 4
        $region36: #{tpu_custom_call.1} parent=31 // pred_fallthru
          _
      $region32: #{tpu_custom_call.1} parent=5 // pred_fallthru
        _
      %p206 = scmp.le.s32.totalorder 1, %s17
      %p207 = scmp.lt.s32.totalorder %s17, 3
      %p208 = pnand %p206, %p207
      %p209 = pneg %p208
      // Predicated region
      $region37: #{tpu_custom_call.1} parent=5 // pred_check
        _
      $region38: #{tpu_custom_call.1} parent=5 // pred_check_branch
        %211 = sbr.rel (%p208) target = $region40
      $region39: #{tpu_custom_call.1} parent=5 // pred_region
        %s212 = ssub.s32 %s17, 1
        %s213 = sand.u32 %s30, 1
        %s214 = scalar_lea.sflag [#allocation3], %s213
        %s215 = sand.u32 %s30, 1
        %s216 = smul.addr %s215, 64
        %s217 = scalar_lea.vmem [#allocation2], %s216
        // Predicated region
        $region41: #{tpu_custom_call.1} parent=39 // pred_check
          %p218 = pneg %p43
        $region42: #{tpu_custom_call.1} parent=39 // pred_check_branch
          %220 = sbr.rel (%p218) target = $region44
        $region43: #{tpu_custom_call.1} parent=39 // pred_region
          %221 = dma.done %s214, 1024
        $region44: #{tpu_custom_call.1} parent=39 // pred_fallthru
          _
        %s222 = sand.u32 %s30, 1
        %s223 = scalar_lea.sflag [#allocation3], %s222
        %s224 = sand.u32 %s30, 1
        %s225 = smul.addr %s224, 64
        %s226 = scalar_lea.vmem [#allocation2], %s225
        %p227 = pneg %p43
        %p228 = pneg %p40
        %p229 = pneg %p64
        %p230 = pneg %p61
        %p231 = pneg %p85
        %p232 = pneg %p82
        %p233 = pneg %p106
        %p234 = pneg %p103
        %p235 = pneg %p127
        %p236 = pneg %p124
        %p237 = pneg %p153
        %p238 = pneg %p150
        %s239 = sand.u32 %s140, 1
        %s240 = scalar_lea.sflag [#allocation4], %s239
        %s241 = sand.u32 %s140, 1
        %s242 = smul.addr %s241, 8
        %s243 = scalar_lea.vmem [#allocation5], %s242
        %s244 = smul.u32 8, %s22
        %v246 = vld [vmem:[%s217] sm:$0xf]
        %v247 = vld [vmem:[%s217 + $0x4] sm:$0xf]
        %v248 = vld [vmem:[%s217 + $0x8] sm:$0xf]
        %v249 = vld [vmem:[%s217 + $0xc] sm:$0xf]
        %v250 = vld [vmem:[%s217 + $0x10] sm:$0xf]
        %v251 = vld [vmem:[%s217 + $0x14] sm:$0xf]
        %v252 = vld [vmem:[%s217 + $0x18] sm:$0xf]
        %v253 = vld [vmem:[%s217 + $0x1c] sm:$0xf]
        %v254 = vld [vmem:[%s217 + $0x20] sm:$0xf]
        %v255 = vld [vmem:[%s217 + $0x24] sm:$0xf]
        %v256 = vld [vmem:[%s217 + $0x28] sm:$0xf]
        %v257 = vld [vmem:[%s217 + $0x2c] sm:$0xf]
        %v258 = vld [vmem:[%s217 + $0x30] sm:$0xf]
        %v259 = vld [vmem:[%s217 + $0x34] sm:$0xf]
        %v260 = vld [vmem:[%s217 + $0x38] sm:$0xf]
        %v261 = vld [vmem:[%s217 + $0x3c] sm:$0xf]
        %v262 = vld [vmem:[%s1] sm:$0xf]
        %v263 = vld [vmem:[%s1 + $0x4] sm:$0xf]
        %v264 = vld [vmem:[%s1 + $0x8] sm:$0xf]
        %v265 = vld [vmem:[%s1 + $0xc] sm:$0xf]
        %v266 = vld [vmem:[%s1 + $0x10] sm:$0xf]
        %v267 = vld [vmem:[%s1 + $0x14] sm:$0xf]
        %v268 = vld [vmem:[%s1 + $0x18] sm:$0xf]
        %v269 = vld [vmem:[%s1 + $0x1c] sm:$0xf]
        %v270 = vld [vmem:[%s2] sm:$0x1]
        %v272 = vlaneseq
        %v273 = vshrl.u32 %v272, 7
        %v274 = vsub.s32 0, %v273
        %v275 = vrot.slane %v270, %v274
        %v293 = vunpack.c.l.b16 %v246
        %v294 = vunpack.c.l.b16 %v247
        %v295 = vunpack.c.l.b16 %v248
        %v296 = vunpack.c.l.b16 %v249
        %v297 = vunpack.c.l.b16 %v250
        %v298 = vunpack.c.l.b16 %v251
        %v299 = vunpack.c.l.b16 %v252
        %v300 = vunpack.c.l.b16 %v253
        %v301 = vunpack.c.l.b16 %v254
        %v302 = vunpack.c.l.b16 %v255
        %v303 = vunpack.c.l.b16 %v256
        %v304 = vunpack.c.l.b16 %v257
        %v305 = vunpack.c.l.b16 %v258
        %v306 = vunpack.c.l.b16 %v259
        %v307 = vunpack.c.l.b16 %v260
        %v308 = vunpack.c.l.b16 %v261
        %v309 = vpack.c.b16 %v294, %v293
        %v310 = vpack.c.b16 %v296, %v295
        %v311 = vpack.c.b16 %v298, %v297
        %v312 = vpack.c.b16 %v300, %v299
        %v313 = vpack.c.b16 %v302, %v301
        %v314 = vpack.c.b16 %v304, %v303
        %v315 = vpack.c.b16 %v306, %v305
        %v316 = vpack.c.b16 %v308, %v307
        %v325 = vunpack.c.l.b16 %v262
        %v326 = vunpack.c.l.b16 %v263
        %v327 = vunpack.c.l.b16 %v264
        %v328 = vunpack.c.l.b16 %v265
        %v329 = vunpack.c.l.b16 %v266
        %v330 = vunpack.c.l.b16 %v267
        %v331 = vunpack.c.l.b16 %v268
        %v332 = vunpack.c.l.b16 %v269
        %v333 = vpack.c.b16 %v326, %v325
        %v334 = vpack.c.b16 %v328, %v327
        %v335 = vpack.c.b16 %v330, %v329
        %v336 = vpack.c.b16 %v332, %v331
        %vm341 = vcmask 523264
        %v343 = vsel %vm341, %v309, 0
        %v346 = vsel %vm341, %v310, 0
        %v349 = vsel %vm341, %v311, 0
        %v352 = vsel %vm341, %v312, 0
        %v355 = vsel %vm341, %v313, 0
        %v358 = vsel %vm341, %v314, 0
        %v361 = vsel %vm341, %v315, 0
        %v364 = vsel %vm341, %v316, 0
        %366 = vmatprep.subr.bf16.mxu0 0
        %367 = vmatpush1.bf16.msra.mxu0 0
        %368 = vmatprep.subr.bf16.mxu0 0
        %369 = vmatpush1.bf16.msra.mxu0 0
        %370 = vmatprep.subr.bf16.mxu0 0
        %371 = vmatpush1.bf16.msra.mxu0 0
        %372 = vmatprep.subr.bf16.mxu0 0
        %373 = vmatpush1.bf16.msra.mxu0 0
        %374 = vmatprep.subr.bf16.mxu0 0
        %375 = vmatpush1.bf16.msra.mxu0 %v336
        %376 = vmatprep.subr.bf16.mxu0 0
        %377 = vmatpush1.bf16.msra.mxu0 %v335
        %378 = vmatprep.subr.bf16.mxu0 0
        %379 = vmatpush1.bf16.msra.mxu0 %v334
        %380 = vmatprep.subr.bf16.mxu0 0
        %381 = vmatpush1.bf16.msra.mxu0 %v333
        %382 = vmatprep.subr.bf16.mxu0 0
        %383 = vmatpush2.bf16.msra.mxu0 0
        %384 = vmatprep.subr.bf16.mxu0 0
        %385 = vmatpush2.bf16.msra.mxu0 0
        %386 = vmatprep.subr.bf16.mxu0 0
        %387 = vmatpush2.bf16.msra.mxu0 0
        %388 = vmatprep.subr.bf16.mxu0 0
        %389 = vmatpush2.bf16.msra.mxu0 0
        %390 = vmatprep.subr.bf16.mxu0 0
        %391 = vmatpush2.bf16.msra.mxu0 0
        %392 = vmatprep.subr.bf16.mxu0 0
        %393 = vmatpush2.bf16.msra.mxu0 0
        %394 = vmatprep.subr.bf16.mxu0 0
        %395 = vmatpush2.bf16.msra.mxu0 0
        %396 = vmatprep.subr.bf16.mxu0 0
        %397 = vmatpush2.bf16.msra.mxu0 0
        %398 = vmatprep.mubr.bf16.mxu0 0
        %399 = vmatmul.mubr.bf16.gmra.mxu0 %v343
        %v400 = vpop.f32.mrf.mxu0
        %v401 = vadd.f32 %v275, %v400
        %v402 = vpop.f32.mrf.mxu0
        %v403 = vpop.f32.mrf.mxu0
        %v404 = vadd.f32 %v275, %v403
        %v405 = vpop.f32.mrf.mxu0
        %406 = vmatprep.mubr.bf16.mxu0 0
        %407 = vmatmul.mubr.bf16.gmra.mxu0 %v346
        %v408 = vpop.f32.mrf.mxu0
        %v409 = vadd.f32 %v275, %v408
        %v410 = vpop.f32.mrf.mxu0
        %v411 = vpop.f32.mrf.mxu0
        %v412 = vadd.f32 %v275, %v411
        %v413 = vpop.f32.mrf.mxu0
        %414 = vmatprep.mubr.bf16.mxu0 0
        %415 = vmatmul.mubr.bf16.gmra.mxu0 %v349
        %v416 = vpop.f32.mrf.mxu0
        %v417 = vadd.f32 %v275, %v416
        %v418 = vpop.f32.mrf.mxu0
        %v419 = vpop.f32.mrf.mxu0
        %v420 = vadd.f32 %v275, %v419
        %v421 = vpop.f32.mrf.mxu0
        %422 = vmatprep.mubr.bf16.mxu0 0
        %423 = vmatmul.mubr.bf16.gmra.mxu0 %v352
        %v424 = vpop.f32.mrf.mxu0
        %v425 = vadd.f32 %v275, %v424
        %v426 = vpop.f32.mrf.mxu0
        %v427 = vpop.f32.mrf.mxu0
        %v428 = vadd.f32 %v275, %v427
        %v429 = vpop.f32.mrf.mxu0
        %430 = vmatprep.mubr.bf16.mxu0 0
        %431 = vmatmul.mubr.bf16.gmra.mxu0 %v355
        %v432 = vpop.f32.mrf.mxu0
        %v433 = vadd.f32 %v275, %v432
        %v434 = vpop.f32.mrf.mxu0
        %v435 = vpop.f32.mrf.mxu0
        %v436 = vadd.f32 %v275, %v435
        %v437 = vpop.f32.mrf.mxu0
        %438 = vmatprep.mubr.bf16.mxu0 0
        %439 = vmatmul.mubr.bf16.gmra.mxu0 %v358
        %v440 = vpop.f32.mrf.mxu0
        %v441 = vadd.f32 %v275, %v440
        %v442 = vpop.f32.mrf.mxu0
        %v443 = vpop.f32.mrf.mxu0
        %v444 = vadd.f32 %v275, %v443
        %v445 = vpop.f32.mrf.mxu0
        %446 = vmatprep.mubr.bf16.mxu0 0
        %447 = vmatmul.mubr.bf16.gmra.mxu0 %v361
        %v448 = vpop.f32.mrf.mxu0
        %v449 = vadd.f32 %v275, %v448
        %v450 = vpop.f32.mrf.mxu0
        %v451 = vpop.f32.mrf.mxu0
        %v452 = vadd.f32 %v275, %v451
        %v453 = vpop.f32.mrf.mxu0
        %454 = vmatprep.mubr.bf16.mxu0 0
        %455 = vmatmul.mubr.bf16.gmra.mxu0 %v364
        %v456 = vpop.f32.mrf.mxu0
        %v457 = vadd.f32 %v275, %v456
        %v458 = vpop.f32.mrf.mxu0
        %v459 = vpop.f32.mrf.mxu0
        %v460 = vadd.f32 %v275, %v459
        %v461 = vpop.f32.mrf.mxu0
        %462 = vdwg.mxu0
        %v463 = vtanh.pop %v401
        %v464 = vtanh.pop %v404
        %v465 = vtanh.pop %v409
        %v466 = vtanh.pop %v412
        %v467 = vtanh.pop %v417
        %v468 = vtanh.pop %v420
        %v469 = vtanh.pop %v425
        %v470 = vtanh.pop %v428
        %v471 = vtanh.pop %v433
        %v472 = vtanh.pop %v436
        %v473 = vtanh.pop %v441
        %v474 = vtanh.pop %v444
        %v475 = vtanh.pop %v449
        %v476 = vtanh.pop %v452
        %v477 = vtanh.pop %v457
        %v478 = vtanh.pop %v460
        %v479 = vpack.c.bf16 %v464, %v463
        %v480 = vpack.c.bf16 %v466, %v465
        %v481 = vpack.c.bf16 %v468, %v467
        %v482 = vpack.c.bf16 %v470, %v469
        %v483 = vpack.c.bf16 %v472, %v471
        %v484 = vpack.c.bf16 %v474, %v473
        %v485 = vpack.c.bf16 %v476, %v475
        %v486 = vpack.c.bf16 %v478, %v477
        %v487 = vld [vmem:[%s3] sm:$0xf]
        %v488 = vld [vmem:[%s3 + $0x4] sm:$0xf]
        %v489 = vld [vmem:[%s3 + $0x8] sm:$0xf]
        %v490 = vld [vmem:[%s3 + $0xc] sm:$0xf]
        %v491 = vld [vmem:[%s3 + $0x10] sm:$0xf]
        %v492 = vld [vmem:[%s3 + $0x14] sm:$0xf]
        %v493 = vld [vmem:[%s3 + $0x18] sm:$0xf]
        %v494 = vld [vmem:[%s3 + $0x1c] sm:$0xf]
        %v503 = vunpack.c.l.b16 %v487
        %v504 = vunpack.c.l.b16 %v488
        %v505 = vunpack.c.l.b16 %v489
        %v506 = vunpack.c.l.b16 %v490
        %v507 = vunpack.c.l.b16 %v491
        %v508 = vunpack.c.l.b16 %v492
        %v509 = vunpack.c.l.b16 %v493
        %v510 = vunpack.c.l.b16 %v494
        %v511 = vpack.c.b16 %v504, %v503
        %v512 = vpack.c.b16 %v506, %v505
        %v513 = vpack.c.b16 %v508, %v507
        %v514 = vpack.c.b16 %v510, %v509
        %v520 = vsel %vm341, %v479, 0
        %v523 = vsel %vm341, %v480, 0
        %v526 = vsel %vm341, %v481, 0
        %v529 = vsel %vm341, %v482, 0
        %v532 = vsel %vm341, %v483, 0
        %v535 = vsel %vm341, %v484, 0
        %v538 = vsel %vm341, %v485, 0
        %v541 = vsel %vm341, %v486, 0
        %543 = vmatprep.subr.bf16.mxu0 0
        %544 = vmatpush1.bf16.msra.mxu0 0
        %545 = vmatprep.subr.bf16.mxu0 0
        %546 = vmatpush1.bf16.msra.mxu0 0
        %547 = vmatprep.subr.bf16.mxu0 0
        %548 = vmatpush1.bf16.msra.mxu0 0
        %549 = vmatprep.subr.bf16.mxu0 0
        %550 = vmatpush1.bf16.msra.mxu0 0
        %551 = vmatprep.subr.bf16.mxu0 0
        %552 = vmatpush1.bf16.msra.mxu0 %v514
        %553 = vmatprep.subr.bf16.mxu0 0
        %554 = vmatpush1.bf16.msra.mxu0 %v513
        %555 = vmatprep.subr.bf16.mxu0 0
        %556 = vmatpush1.bf16.msra.mxu0 %v512
        %557 = vmatprep.subr.bf16.mxu0 0
        %558 = vmatpush1.bf16.msra.mxu0 %v511
        %559 = vmatprep.subr.bf16.mxu0 0
        %560 = vmatpush2.bf16.msra.mxu0 0
        %561 = vmatprep.subr.bf16.mxu0 0
        %562 = vmatpush2.bf16.msra.mxu0 0
        %563 = vmatprep.subr.bf16.mxu0 0
        %564 = vmatpush2.bf16.msra.mxu0 0
        %565 = vmatprep.subr.bf16.mxu0 0
        %566 = vmatpush2.bf16.msra.mxu0 0
        %567 = vmatprep.subr.bf16.mxu0 0
        %568 = vmatpush2.bf16.msra.mxu0 0
        %569 = vmatprep.subr.bf16.mxu0 0
        %570 = vmatpush2.bf16.msra.mxu0 0
        %571 = vmatprep.subr.bf16.mxu0 0
        %572 = vmatpush2.bf16.msra.mxu0 0
        %573 = vmatprep.subr.bf16.mxu0 0
        %574 = vmatpush2.bf16.msra.mxu0 0
        %575 = vmatprep.mubr.bf16.mxu0 0
        %576 = vmatmul.mubr.bf16.gmra.mxu0 %v520
        %v577 = vpop.f32.mrf.mxu0
        %v578 = vadd.f32 0.0, %v577
        %v579 = vpop.f32.mrf.mxu0
        %v580 = vpop.f32.mrf.mxu0
        %v581 = vadd.f32 0.0, %v580
        %v582 = vpop.f32.mrf.mxu0
        %583 = vmatprep.mubr.bf16.mxu0 0
        %584 = vmatmul.mubr.bf16.gmra.mxu0 %v523
        %v585 = vpop.f32.mrf.mxu0
        %v586 = vadd.f32 0.0, %v585
        %v587 = vpop.f32.mrf.mxu0
        %v588 = vpop.f32.mrf.mxu0
        %v589 = vadd.f32 0.0, %v588
        %v590 = vpop.f32.mrf.mxu0
        %591 = vmatprep.mubr.bf16.mxu0 0
        %592 = vmatmul.mubr.bf16.gmra.mxu0 %v526
        %v593 = vpop.f32.mrf.mxu0
        %v594 = vadd.f32 0.0, %v593
        %v595 = vpop.f32.mrf.mxu0
        %v596 = vpop.f32.mrf.mxu0
        %v597 = vadd.f32 0.0, %v596
        %v598 = vpop.f32.mrf.mxu0
        %599 = vmatprep.mubr.bf16.mxu0 0
        %600 = vmatmul.mubr.bf16.gmra.mxu0 %v529
        %v601 = vpop.f32.mrf.mxu0
        %v602 = vadd.f32 0.0, %v601
        %v603 = vpop.f32.mrf.mxu0
        %v604 = vpop.f32.mrf.mxu0
        %v605 = vadd.f32 0.0, %v604
        %v606 = vpop.f32.mrf.mxu0
        %607 = vmatprep.mubr.bf16.mxu0 0
        %608 = vmatmul.mubr.bf16.gmra.mxu0 %v532
        %v609 = vpop.f32.mrf.mxu0
        %v610 = vadd.f32 0.0, %v609
        %v611 = vpop.f32.mrf.mxu0
        %v612 = vpop.f32.mrf.mxu0
        %v613 = vadd.f32 0.0, %v612
        %v614 = vpop.f32.mrf.mxu0
        %615 = vmatprep.mubr.bf16.mxu0 0
        %616 = vmatmul.mubr.bf16.gmra.mxu0 %v535
        %v617 = vpop.f32.mrf.mxu0
        %v618 = vadd.f32 0.0, %v617
        %v619 = vpop.f32.mrf.mxu0
        %v620 = vpop.f32.mrf.mxu0
        %v621 = vadd.f32 0.0, %v620
        %v622 = vpop.f32.mrf.mxu0
        %623 = vmatprep.mubr.bf16.mxu0 0
        %624 = vmatmul.mubr.bf16.gmra.mxu0 %v538
        %v625 = vpop.f32.mrf.mxu0
        %v626 = vadd.f32 0.0, %v625
        %v627 = vpop.f32.mrf.mxu0
        %v628 = vpop.f32.mrf.mxu0
        %v629 = vadd.f32 0.0, %v628
        %v630 = vpop.f32.mrf.mxu0
        %631 = vmatprep.mubr.bf16.mxu0 0
        %632 = vmatmul.mubr.bf16.gmra.mxu0 %v541
        %v633 = vpop.f32.mrf.mxu0
        %v634 = vadd.f32 0.0, %v633
        %v635 = vpop.f32.mrf.mxu0
        %v636 = vpop.f32.mrf.mxu0
        %v637 = vadd.f32 0.0, %v636
        %v638 = vpop.f32.mrf.mxu0
        %639 = vdwg.mxu0
        %v640 = vunpack.c.l.bf16 %v246
        %v641 = vunpack.c.l.bf16 %v247
        %v642 = vunpack.c.l.bf16 %v248
        %v643 = vunpack.c.l.bf16 %v249
        %v644 = vunpack.c.l.bf16 %v250
        %v645 = vunpack.c.l.bf16 %v251
        %v646 = vunpack.c.l.bf16 %v252
        %v647 = vunpack.c.l.bf16 %v253
        %v648 = vunpack.c.l.bf16 %v254
        %v649 = vunpack.c.l.bf16 %v255
        %v650 = vunpack.c.l.bf16 %v256
        %v651 = vunpack.c.l.bf16 %v257
        %v652 = vunpack.c.l.bf16 %v258
        %v653 = vunpack.c.l.bf16 %v259
        %v654 = vunpack.c.l.bf16 %v260
        %v655 = vunpack.c.l.bf16 %v261
        %v656 = vsel %vm341, %v640, 0.0
        %657 = vadd.xlane.f32.xlu0 %v656
        %v658 = vpop.xlane.xlu0 %657
        %v659 = vsel %vm341, %v641, 0.0
        %660 = vadd.xlane.f32.xlu0 %v659
        %v661 = vpop.xlane.xlu0 %660
        %v662 = vsel %vm341, %v642, 0.0
        %663 = vadd.xlane.f32.xlu0 %v662
        %v664 = vpop.xlane.xlu0 %663
        %v665 = vsel %vm341, %v643, 0.0
        %666 = vadd.xlane.f32.xlu0 %v665
        %v667 = vpop.xlane.xlu0 %666
        %v668 = vsel %vm341, %v644, 0.0
        %669 = vadd.xlane.f32.xlu0 %v668
        %v670 = vpop.xlane.xlu0 %669
        %v671 = vsel %vm341, %v645, 0.0
        %672 = vadd.xlane.f32.xlu0 %v671
        %v673 = vpop.xlane.xlu0 %672
        %v674 = vsel %vm341, %v646, 0.0
        %675 = vadd.xlane.f32.xlu0 %v674
        %v676 = vpop.xlane.xlu0 %675
        %v677 = vsel %vm341, %v647, 0.0
        %678 = vadd.xlane.f32.xlu0 %v677
        %v679 = vpop.xlane.xlu0 %678
        %v680 = vsel %vm341, %v648, 0.0
        %681 = vadd.xlane.f32.xlu0 %v680
        %v682 = vpop.xlane.xlu0 %681
        %v683 = vsel %vm341, %v649, 0.0
        %684 = vadd.xlane.f32.xlu0 %v683
        %v685 = vpop.xlane.xlu0 %684
        %v686 = vsel %vm341, %v650, 0.0
        %687 = vadd.xlane.f32.xlu0 %v686
        %v688 = vpop.xlane.xlu0 %687
        %v689 = vsel %vm341, %v651, 0.0
        %690 = vadd.xlane.f32.xlu0 %v689
        %v691 = vpop.xlane.xlu0 %690
        %v692 = vsel %vm341, %v652, 0.0
        %693 = vadd.xlane.f32.xlu0 %v692
        %v694 = vpop.xlane.xlu0 %693
        %v695 = vsel %vm341, %v653, 0.0
        %696 = vadd.xlane.f32.xlu0 %v695
        %v697 = vpop.xlane.xlu0 %696
        %v698 = vsel %vm341, %v654, 0.0
        %699 = vadd.xlane.f32.xlu0 %v698
        %v700 = vpop.xlane.xlu0 %699
        %v701 = vsel %vm341, %v655, 0.0
        %702 = vadd.xlane.f32.xlu0 %v701
        %v703 = vpop.xlane.xlu0 %702
        %vm704 = vcmp.eq.f32.partialorder %v658, 0.0
        %vm705 = vcmp.eq.f32.partialorder %v661, 0.0
        %vm706 = vcmp.eq.f32.partialorder %v664, 0.0
        %vm707 = vcmp.eq.f32.partialorder %v667, 0.0
        %vm708 = vcmp.eq.f32.partialorder %v670, 0.0
        %vm709 = vcmp.eq.f32.partialorder %v673, 0.0
        %vm710 = vcmp.eq.f32.partialorder %v676, 0.0
        %vm711 = vcmp.eq.f32.partialorder %v679, 0.0
        %vm712 = vcmp.eq.f32.partialorder %v682, 0.0
        %vm713 = vcmp.eq.f32.partialorder %v685, 0.0
        %vm714 = vcmp.eq.f32.partialorder %v688, 0.0
        %vm715 = vcmp.eq.f32.partialorder %v691, 0.0
        %vm716 = vcmp.eq.f32.partialorder %v694, 0.0
        %vm717 = vcmp.eq.f32.partialorder %v697, 0.0
        %vm718 = vcmp.eq.f32.partialorder %v700, 0.0
        %vm719 = vcmp.eq.f32.partialorder %v703, 0.0
        %v720 = vsel %vm704, 1, 0
        %v721 = vsel %vm705, 1, 0
        %v722 = vsel %vm706, 1, 0
        %v723 = vsel %vm707, 1, 0
        %v724 = vsel %vm708, 1, 0
        %v725 = vsel %vm709, 1, 0
        %v726 = vsel %vm710, 1, 0
        %v727 = vsel %vm711, 1, 0
        %v728 = vsel %vm712, 1, 0
        %v729 = vsel %vm713, 1, 0
        %v730 = vsel %vm714, 1, 0
        %v731 = vsel %vm715, 1, 0
        %v732 = vsel %vm716, 1, 0
        %v733 = vsel %vm717, 1, 0
        %v734 = vsel %vm718, 1, 0
        %v735 = vsel %vm719, 1, 0
        %vm736 = vcmp.eq.s32.totalorder %v720, 1
        %vm737 = vcmp.eq.s32.totalorder %v721, 1
        %vm738 = vcmp.eq.s32.totalorder %v722, 1
        %vm739 = vcmp.eq.s32.totalorder %v723, 1
        %vm740 = vcmp.eq.s32.totalorder %v724, 1
        %vm741 = vcmp.eq.s32.totalorder %v725, 1
        %vm742 = vcmp.eq.s32.totalorder %v726, 1
        %vm743 = vcmp.eq.s32.totalorder %v727, 1
        %vm744 = vcmp.eq.s32.totalorder %v728, 1
        %vm745 = vcmp.eq.s32.totalorder %v729, 1
        %vm746 = vcmp.eq.s32.totalorder %v730, 1
        %vm747 = vcmp.eq.s32.totalorder %v731, 1
        %vm748 = vcmp.eq.s32.totalorder %v732, 1
        %vm749 = vcmp.eq.s32.totalorder %v733, 1
        %vm750 = vcmp.eq.s32.totalorder %v734, 1
        %vm751 = vcmp.eq.s32.totalorder %v735, 1
        %v752 = vsel %vm736, -1e+10, %v578
        %v753 = vsel %vm737, -1e+10, %v581
        %v754 = vsel %vm738, -1e+10, %v586
        %v755 = vsel %vm739, -1e+10, %v589
        %v756 = vsel %vm740, -1e+10, %v594
        %v757 = vsel %vm741, -1e+10, %v597
        %v758 = vsel %vm742, -1e+10, %v602
        %v759 = vsel %vm743, -1e+10, %v605
        %v760 = vsel %vm744, -1e+10, %v610
        %v761 = vsel %vm745, -1e+10, %v613
        %v762 = vsel %vm746, -1e+10, %v618
        %v763 = vsel %vm747, -1e+10, %v621
        %v764 = vsel %vm748, -1e+10, %v626
        %v765 = vsel %vm749, -1e+10, %v629
        %v766 = vsel %vm750, -1e+10, %v634
        %v767 = vsel %vm751, -1e+10, %v637
        %768 = vxpose.xlu0.b32.start [1/16] %v752, 128
        %769 = vxpose.xlu0.b32.cont [2/16] %v753, 128
        %770 = vxpose.xlu0.b32.cont [3/16] 0.0, 128
        %771 = vxpose.xlu0.b32.cont [4/16] 0.0, 128
        %772 = vxpose.xlu0.b32.cont [5/16] 0.0, 128
        %773 = vxpose.xlu0.b32.cont [6/16] 0.0, 128
        %774 = vxpose.xlu0.b32.cont [7/16] 0.0, 128
        %775 = vxpose.xlu0.b32.cont [8/16] 0.0, 128
        %776 = vxpose.xlu0.b32.cont [9/16] 0.0, 128
        %777 = vxpose.xlu0.b32.cont [10/16] 0.0, 128
        %778 = vxpose.xlu0.b32.cont [11/16] 0.0, 128
        %779 = vxpose.xlu0.b32.cont [12/16] 0.0, 128
        %780 = vxpose.xlu0.b32.cont [13/16] 0.0, 128
        %781 = vxpose.xlu0.b32.cont [14/16] 0.0, 128
        %782 = vxpose.xlu0.b32.cont [15/16] 0.0, 128
        %783 = vxpose.xlu0.b32.end [16/16] 0.0, 128
        %v784 = vpop.trf.xlu0
        %v785 = vpop.trf.xlu0
        %v786 = vpop.trf.xlu0
        %v787 = vpop.trf.xlu0
        %v788 = vpop.trf.xlu0
        %v789 = vpop.trf.xlu0
        %v790 = vpop.trf.xlu0
        %v791 = vpop.trf.xlu0
        %v792 = vpop.trf.xlu0
        %v793 = vpop.trf.xlu0
        %v794 = vpop.trf.xlu0
        %v795 = vpop.trf.xlu0
        %v796 = vpop.trf.xlu0
        %v797 = vpop.trf.xlu0
        %v798 = vpop.trf.xlu0
        %v799 = vpop.trf.xlu0
        %800 = vxpose.xlu0.b32.start [1/16] %v754, 128
        %801 = vxpose.xlu0.b32.cont [2/16] %v755, 128
        %802 = vxpose.xlu0.b32.cont [3/16] 0.0, 128
        %803 = vxpose.xlu0.b32.cont [4/16] 0.0, 128
        %804 = vxpose.xlu0.b32.cont [5/16] 0.0, 128
        %805 = vxpose.xlu0.b32.cont [6/16] 0.0, 128
        %806 = vxpose.xlu0.b32.cont [7/16] 0.0, 128
        %807 = vxpose.xlu0.b32.cont [8/16] 0.0, 128
        %808 = vxpose.xlu0.b32.cont [9/16] 0.0, 128
        %809 = vxpose.xlu0.b32.cont [10/16] 0.0, 128
        %810 = vxpose.xlu0.b32.cont [11/16] 0.0, 128
        %811 = vxpose.xlu0.b32.cont [12/16] 0.0, 128
        %812 = vxpose.xlu0.b32.cont [13/16] 0.0, 128
        %813 = vxpose.xlu0.b32.cont [14/16] 0.0, 128
        %814 = vxpose.xlu0.b32.cont [15/16] 0.0, 128
        %815 = vxpose.xlu0.b32.end [16/16] 0.0, 128
        %v816 = vpop.trf.xlu0
        %v817 = vpop.trf.xlu0
        %v818 = vpop.trf.xlu0
        %v819 = vpop.trf.xlu0
        %v820 = vpop.trf.xlu0
        %v821 = vpop.trf.xlu0
        %v822 = vpop.trf.xlu0
        %v823 = vpop.trf.xlu0
        %v824 = vpop.trf.xlu0
        %v825 = vpop.trf.xlu0
        %v826 = vpop.trf.xlu0
        %v827 = vpop.trf.xlu0
        %v828 = vpop.trf.xlu0
        %v829 = vpop.trf.xlu0
        %v830 = vpop.trf.xlu0
        %v831 = vpop.trf.xlu0
        %832 = vxpose.xlu0.b32.start [1/16] %v756, 128
        %833 = vxpose.xlu0.b32.cont [2/16] %v757, 128
        %834 = vxpose.xlu0.b32.cont [3/16] 0.0, 128
        %835 = vxpose.xlu0.b32.cont [4/16] 0.0, 128
        %836 = vxpose.xlu0.b32.cont [5/16] 0.0, 128
        %837 = vxpose.xlu0.b32.cont [6/16] 0.0, 128
        %838 = vxpose.xlu0.b32.cont [7/16] 0.0, 128
        %839 = vxpose.xlu0.b32.cont [8/16] 0.0, 128
        %840 = vxpose.xlu0.b32.cont [9/16] 0.0, 128
        %841 = vxpose.xlu0.b32.cont [10/16] 0.0, 128
        %842 = vxpose.xlu0.b32.cont [11/16] 0.0, 128
        %843 = vxpose.xlu0.b32.cont [12/16] 0.0, 128
        %844 = vxpose.xlu0.b32.cont [13/16] 0.0, 128
        %845 = vxpose.xlu0.b32.cont [14/16] 0.0, 128
        %846 = vxpose.xlu0.b32.cont [15/16] 0.0, 128
        %847 = vxpose.xlu0.b32.end [16/16] 0.0, 128
        %v848 = vpop.trf.xlu0
        %v849 = vpop.trf.xlu0
        %v850 = vpop.trf.xlu0
        %v851 = vpop.trf.xlu0
        %v852 = vpop.trf.xlu0
        %v853 = vpop.trf.xlu0
        %v854 = vpop.trf.xlu0
        %v855 = vpop.trf.xlu0
        %v856 = vpop.trf.xlu0
        %v857 = vpop.trf.xlu0
        %v858 = vpop.trf.xlu0
        %v859 = vpop.trf.xlu0
        %v860 = vpop.trf.xlu0
        %v861 = vpop.trf.xlu0
        %v862 = vpop.trf.xlu0
        %v863 = vpop.trf.xlu0
        %864 = vxpose.xlu0.b32.start [1/16] %v758, 128
        %865 = vxpose.xlu0.b32.cont [2/16] %v759, 128
        %866 = vxpose.xlu0.b32.cont [3/16] 0.0, 128
        %867 = vxpose.xlu0.b32.cont [4/16] 0.0, 128
        %868 = vxpose.xlu0.b32.cont [5/16] 0.0, 128
        %869 = vxpose.xlu0.b32.cont [6/16] 0.0, 128
        %870 = vxpose.xlu0.b32.cont [7/16] 0.0, 128
        %871 = vxpose.xlu0.b32.cont [8/16] 0.0, 128
        %872 = vxpose.xlu0.b32.cont [9/16] 0.0, 128
        %873 = vxpose.xlu0.b32.cont [10/16] 0.0, 128
        %874 = vxpose.xlu0.b32.cont [11/16] 0.0, 128
        %875 = vxpose.xlu0.b32.cont [12/16] 0.0, 128
        %876 = vxpose.xlu0.b32.cont [13/16] 0.0, 128
        %877 = vxpose.xlu0.b32.cont [14/16] 0.0, 128
        %878 = vxpose.xlu0.b32.cont [15/16] 0.0, 128
        %879 = vxpose.xlu0.b32.end [16/16] 0.0, 128
        %v880 = vpop.trf.xlu0
        %v881 = vpop.trf.xlu0
        %v882 = vpop.trf.xlu0
        %v883 = vpop.trf.xlu0
        %v884 = vpop.trf.xlu0
        %v885 = vpop.trf.xlu0
        %v886 = vpop.trf.xlu0
        %v887 = vpop.trf.xlu0
        %v888 = vpop.trf.xlu0
        %v889 = vpop.trf.xlu0
        %v890 = vpop.trf.xlu0
        %v891 = vpop.trf.xlu0
        %v892 = vpop.trf.xlu0
        %v893 = vpop.trf.xlu0
        %v894 = vpop.trf.xlu0
        %v895 = vpop.trf.xlu0
        %896 = vxpose.xlu0.b32.start [1/16] %v760, 128
        %897 = vxpose.xlu0.b32.cont [2/16] %v761, 128
        %898 = vxpose.xlu0.b32.cont [3/16] 0.0, 128
        %899 = vxpose.xlu0.b32.cont [4/16] 0.0, 128
        %900 = vxpose.xlu0.b32.cont [5/16] 0.0, 128
        %901 = vxpose.xlu0.b32.cont [6/16] 0.0, 128
        %902 = vxpose.xlu0.b32.cont [7/16] 0.0, 128
        %903 = vxpose.xlu0.b32.cont [8/16] 0.0, 128
        %904 = vxpose.xlu0.b32.cont [9/16] 0.0, 128
        %905 = vxpose.xlu0.b32.cont [10/16] 0.0, 128
        %906 = vxpose.xlu0.b32.cont [11/16] 0.0, 128
        %907 = vxpose.xlu0.b32.cont [12/16] 0.0, 128
        %908 = vxpose.xlu0.b32.cont [13/16] 0.0, 128
        %909 = vxpose.xlu0.b32.cont [14/16] 0.0, 128
        %910 = vxpose.xlu0.b32.cont [15/16] 0.0, 128
        %911 = vxpose.xlu0.b32.end [16/16] 0.0, 128
        %v912 = vpop.trf.xlu0
        %v913 = vpop.trf.xlu0
        %v914 = vpop.trf.xlu0
        %v915 = vpop.trf.xlu0
        %v916 = vpop.trf.xlu0
        %v917 = vpop.trf.xlu0
        %v918 = vpop.trf.xlu0
        %v919 = vpop.trf.xlu0
        %v920 = vpop.trf.xlu0
        %v921 = vpop.trf.xlu0
        %v922 = vpop.trf.xlu0
        %v923 = vpop.trf.xlu0
        %v924 = vpop.trf.xlu0
        %v925 = vpop.trf.xlu0
        %v926 = vpop.trf.xlu0
        %v927 = vpop.trf.xlu0
        %928 = vxpose.xlu0.b32.start [1/16] %v762, 128
        %929 = vxpose.xlu0.b32.cont [2/16] %v763, 128
        %930 = vxpose.xlu0.b32.cont [3/16] 0.0, 128
        %931 = vxpose.xlu0.b32.cont [4/16] 0.0, 128
        %932 = vxpose.xlu0.b32.cont [5/16] 0.0, 128
        %933 = vxpose.xlu0.b32.cont [6/16] 0.0, 128
        %934 = vxpose.xlu0.b32.cont [7/16] 0.0, 128
        %935 = vxpose.xlu0.b32.cont [8/16] 0.0, 128
        %936 = vxpose.xlu0.b32.cont [9/16] 0.0, 128
        %937 = vxpose.xlu0.b32.cont [10/16] 0.0, 128
        %938 = vxpose.xlu0.b32.cont [11/16] 0.0, 128
        %939 = vxpose.xlu0.b32.cont [12/16] 0.0, 128
        %940 = vxpose.xlu0.b32.cont [13/16] 0.0, 128
        %941 = vxpose.xlu0.b32.cont [14/16] 0.0, 128
        %942 = vxpose.xlu0.b32.cont [15/16] 0.0, 128
        %943 = vxpose.xlu0.b32.end [16/16] 0.0, 128
        %v944 = vpop.trf.xlu0
        %v945 = vpop.trf.xlu0
        %v946 = vpop.trf.xlu0
        %v947 = vpop.trf.xlu0
        %v948 = vpop.trf.xlu0
        %v949 = vpop.trf.xlu0
        %v950 = vpop.trf.xlu0
        %v951 = vpop.trf.xlu0
        %v952 = vpop.trf.xlu0
        %v953 = vpop.trf.xlu0
        %v954 = vpop.trf.xlu0
        %v955 = vpop.trf.xlu0
        %v956 = vpop.trf.xlu0
        %v957 = vpop.trf.xlu0
        %v958 = vpop.trf.xlu0
        %v959 = vpop.trf.xlu0
        %960 = vxpose.xlu0.b32.start [1/16] %v764, 128
        %961 = vxpose.xlu0.b32.cont [2/16] %v765, 128
        %962 = vxpose.xlu0.b32.cont [3/16] 0.0, 128
        %963 = vxpose.xlu0.b32.cont [4/16] 0.0, 128
        %964 = vxpose.xlu0.b32.cont [5/16] 0.0, 128
        %965 = vxpose.xlu0.b32.cont [6/16] 0.0, 128
        %966 = vxpose.xlu0.b32.cont [7/16] 0.0, 128
        %967 = vxpose.xlu0.b32.cont [8/16] 0.0, 128
        %968 = vxpose.xlu0.b32.cont [9/16] 0.0, 128
        %969 = vxpose.xlu0.b32.cont [10/16] 0.0, 128
        %970 = vxpose.xlu0.b32.cont [11/16] 0.0, 128
        %971 = vxpose.xlu0.b32.cont [12/16] 0.0, 128
        %972 = vxpose.xlu0.b32.cont [13/16] 0.0, 128
        %973 = vxpose.xlu0.b32.cont [14/16] 0.0, 128
        %974 = vxpose.xlu0.b32.cont [15/16] 0.0, 128
        %975 = vxpose.xlu0.b32.end [16/16] 0.0, 128
        %v976 = vpop.trf.xlu0
        %v977 = vpop.trf.xlu0
        %v978 = vpop.trf.xlu0
        %v979 = vpop.trf.xlu0
        %v980 = vpop.trf.xlu0
        %v981 = vpop.trf.xlu0
        %v982 = vpop.trf.xlu0
        %v983 = vpop.trf.xlu0
        %v984 = vpop.trf.xlu0
        %v985 = vpop.trf.xlu0
        %v986 = vpop.trf.xlu0
        %v987 = vpop.trf.xlu0
        %v988 = vpop.trf.xlu0
        %v989 = vpop.trf.xlu0
        %v990 = vpop.trf.xlu0
        %v991 = vpop.trf.xlu0
        %992 = vxpose.xlu0.b32.start [1/16] %v766, 128
        %993 = vxpose.xlu0.b32.cont [2/16] %v767, 128
        %994 = vxpose.xlu0.b32.cont [3/16] 0.0, 128
        %995 = vxpose.xlu0.b32.cont [4/16] 0.0, 128
        %996 = vxpose.xlu0.b32.cont [5/16] 0.0, 128
        %997 = vxpose.xlu0.b32.cont [6/16] 0.0, 128
        %998 = vxpose.xlu0.b32.cont [7/16] 0.0, 128
        %999 = vxpose.xlu0.b32.cont [8/16] 0.0, 128
        %1000 = vxpose.xlu0.b32.cont [9/16] 0.0, 128
        %1001 = vxpose.xlu0.b32.cont [10/16] 0.0, 128
        %1002 = vxpose.xlu0.b32.cont [11/16] 0.0, 128
        %1003 = vxpose.xlu0.b32.cont [12/16] 0.0, 128
        %1004 = vxpose.xlu0.b32.cont [13/16] 0.0, 128
        %1005 = vxpose.xlu0.b32.cont [14/16] 0.0, 128
        %1006 = vxpose.xlu0.b32.cont [15/16] 0.0, 128
        %1007 = vxpose.xlu0.b32.end [16/16] 0.0, 128
        %v1008 = vpop.trf.xlu0
        %v1009 = vpop.trf.xlu0
        %v1010 = vpop.trf.xlu0
        %v1011 = vpop.trf.xlu0
        %v1012 = vpop.trf.xlu0
        %v1013 = vpop.trf.xlu0
        %v1014 = vpop.trf.xlu0
        %v1015 = vpop.trf.xlu0
        %v1016 = vpop.trf.xlu0
        %v1017 = vpop.trf.xlu0
        %v1018 = vpop.trf.xlu0
        %v1019 = vpop.trf.xlu0
        %v1020 = vpop.trf.xlu0
        %v1021 = vpop.trf.xlu0
        %v1022 = vpop.trf.xlu0
        %v1023 = vpop.trf.xlu0
        %vm1024 = vcmask 125952
        %v1025 = vsel %vm1024, %v784, -inf
        %1026 = vmax.xlane.f32.xlu0 %v1025
        %v1027 = vpop.xlane.xlu0 %1026
        %v1028 = vsel %vm1024, %v816, -inf
        %1029 = vmax.xlane.f32.xlu0 %v1028
        %v1030 = vpop.xlane.xlu0 %1029
        %v1031 = vsel %vm1024, %v848, -inf
        %1032 = vmax.xlane.f32.xlu0 %v1031
        %v1033 = vpop.xlane.xlu0 %1032
        %v1034 = vsel %vm1024, %v880, -inf
        %1035 = vmax.xlane.f32.xlu0 %v1034
        %v1036 = vpop.xlane.xlu0 %1035
        %v1037 = vsel %vm1024, %v912, -inf
        %1038 = vmax.xlane.f32.xlu0 %v1037
        %v1039 = vpop.xlane.xlu0 %1038
        %v1040 = vsel %vm1024, %v944, -inf
        %1041 = vmax.xlane.f32.xlu0 %v1040
        %v1042 = vpop.xlane.xlu0 %1041
        %v1043 = vsel %vm1024, %v976, -inf
        %1044 = vmax.xlane.f32.xlu0 %v1043
        %v1045 = vpop.xlane.xlu0 %1044
        %v1046 = vsel %vm1024, %v1008, -inf
        %1047 = vmax.xlane.f32.xlu0 %v1046
        %v1048 = vpop.xlane.xlu0 %1047
        %v1049 = vsub.f32 %v784, %v1027
        %v1050 = vsub.f32 %v816, %v1030
        %v1051 = vsub.f32 %v848, %v1033
        %v1052 = vsub.f32 %v880, %v1036
        %v1053 = vsub.f32 %v912, %v1039
        %v1054 = vsub.f32 %v944, %v1042
        %v1055 = vsub.f32 %v976, %v1045
        %v1056 = vsub.f32 %v1008, %v1048
        %v1057 = vmul.f32 %v1049, 1.442695
        %v1058 = vpow.pop %v1057
        %v1059 = vmul.f32 %v1050, 1.442695
        %v1060 = vpow.pop %v1059
        %v1061 = vmul.f32 %v1051, 1.442695
        %v1062 = vpow.pop %v1061
        %v1063 = vmul.f32 %v1052, 1.442695
        %v1064 = vpow.pop %v1063
        %v1065 = vmul.f32 %v1053, 1.442695
        %v1066 = vpow.pop %v1065
        %v1067 = vmul.f32 %v1054, 1.442695
        %v1068 = vpow.pop %v1067
        %v1069 = vmul.f32 %v1055, 1.442695
        %v1070 = vpow.pop %v1069
        %v1071 = vmul.f32 %v1056, 1.442695
        %v1072 = vpow.pop %v1071
        %v1073 = vsel %vm1024, %v1058, 0.0
        %1074 = vadd.xlane.f32.xlu0 %v1073
        %v1075 = vpop.xlane.xlu0 %1074
        %v1076 = vsel %vm1024, %v1060, 0.0
        %1077 = vadd.xlane.f32.xlu0 %v1076
        %v1078 = vpop.xlane.xlu0 %1077
        %v1079 = vsel %vm1024, %v1062, 0.0
        %1080 = vadd.xlane.f32.xlu0 %v1079
        %v1081 = vpop.xlane.xlu0 %1080
        %v1082 = vsel %vm1024, %v1064, 0.0
        %1083 = vadd.xlane.f32.xlu0 %v1082
        %v1084 = vpop.xlane.xlu0 %1083
        %v1085 = vsel %vm1024, %v1066, 0.0
        %1086 = vadd.xlane.f32.xlu0 %v1085
        %v1087 = vpop.xlane.xlu0 %1086
        %v1088 = vsel %vm1024, %v1068, 0.0
        %1089 = vadd.xlane.f32.xlu0 %v1088
        %v1090 = vpop.xlane.xlu0 %1089
        %v1091 = vsel %vm1024, %v1070, 0.0
        %1092 = vadd.xlane.f32.xlu0 %v1091
        %v1093 = vpop.xlane.xlu0 %1092
        %v1094 = vsel %vm1024, %v1072, 0.0
        %1095 = vadd.xlane.f32.xlu0 %v1094
        %v1096 = vpop.xlane.xlu0 %1095
        %v1097 = vrcp.pop %v1075
        %v1098 = vrcp.pop %v1078
        %v1099 = vrcp.pop %v1081
        %v1100 = vrcp.pop %v1084
        %v1101 = vrcp.pop %v1087
        %v1102 = vrcp.pop %v1090
        %v1103 = vrcp.pop %v1093
        %v1104 = vrcp.pop %v1096
        %v1105 = vmul.f32 %v1058, %v1097
        %v1106 = vmul.f32 %v1060, %v1098
        %v1107 = vmul.f32 %v1062, %v1099
        %v1108 = vmul.f32 %v1064, %v1100
        %v1109 = vmul.f32 %v1066, %v1101
        %v1110 = vmul.f32 %v1068, %v1102
        %v1111 = vmul.f32 %v1070, %v1103
        %v1112 = vmul.f32 %v1072, %v1104
        %1113 = vxpose.xlu0.b32.start [1/16] %v1105, 128
        %1114 = vxpose.xlu0.b32.cont [2/16] 0.0, 128
        %1115 = vxpose.xlu0.b32.cont [3/16] 0.0, 128
        %1116 = vxpose.xlu0.b32.cont [4/16] 0.0, 128
        %1117 = vxpose.xlu0.b32.cont [5/16] 0.0, 128
        %1118 = vxpose.xlu0.b32.cont [6/16] 0.0, 128
        %1119 = vxpose.xlu0.b32.cont [7/16] 0.0, 128
        %1120 = vxpose.xlu0.b32.cont [8/16] 0.0, 128
        %1121 = vxpose.xlu0.b32.cont [9/16] 0.0, 128
        %1122 = vxpose.xlu0.b32.cont [10/16] 0.0, 128
        %1123 = vxpose.xlu0.b32.cont [11/16] 0.0, 128
        %1124 = vxpose.xlu0.b32.cont [12/16] 0.0, 128
        %1125 = vxpose.xlu0.b32.cont [13/16] 0.0, 128
        %1126 = vxpose.xlu0.b32.cont [14/16] 0.0, 128
        %1127 = vxpose.xlu0.b32.cont [15/16] 0.0, 128
        %1128 = vxpose.xlu0.b32.end [16/16] 0.0, 128
        %v1129 = vpop.trf.xlu0
        %v1130 = vpop.trf.xlu0
        %v1131 = vpop.trf.xlu0
        %v1132 = vpop.trf.xlu0
        %v1133 = vpop.trf.xlu0
        %v1134 = vpop.trf.xlu0
        %v1135 = vpop.trf.xlu0
        %v1136 = vpop.trf.xlu0
        %v1137 = vpop.trf.xlu0
        %v1138 = vpop.trf.xlu0
        %v1139 = vpop.trf.xlu0
        %v1140 = vpop.trf.xlu0
        %v1141 = vpop.trf.xlu0
        %v1142 = vpop.trf.xlu0
        %v1143 = vpop.trf.xlu0
        %v1144 = vpop.trf.xlu0
        %1145 = vxpose.xlu0.b32.start [1/16] %v1106, 128
        %1146 = vxpose.xlu0.b32.cont [2/16] 0.0, 128
        %1147 = vxpose.xlu0.b32.cont [3/16] 0.0, 128
        %1148 = vxpose.xlu0.b32.cont [4/16] 0.0, 128
        %1149 = vxpose.xlu0.b32.cont [5/16] 0.0, 128
        %1150 = vxpose.xlu0.b32.cont [6/16] 0.0, 128
        %1151 = vxpose.xlu0.b32.cont [7/16] 0.0, 128
        %1152 = vxpose.xlu0.b32.cont [8/16] 0.0, 128
        %1153 = vxpose.xlu0.b32.cont [9/16] 0.0, 128
        %1154 = vxpose.xlu0.b32.cont [10/16] 0.0, 128
        %1155 = vxpose.xlu0.b32.cont [11/16] 0.0, 128
        %1156 = vxpose.xlu0.b32.cont [12/16] 0.0, 128
        %1157 = vxpose.xlu0.b32.cont [13/16] 0.0, 128
        %1158 = vxpose.xlu0.b32.cont [14/16] 0.0, 128
        %1159 = vxpose.xlu0.b32.cont [15/16] 0.0, 128
        %1160 = vxpose.xlu0.b32.end [16/16] 0.0, 128
        %v1161 = vpop.trf.xlu0
        %v1162 = vpop.trf.xlu0
        %v1163 = vpop.trf.xlu0
        %v1164 = vpop.trf.xlu0
        %v1165 = vpop.trf.xlu0
        %v1166 = vpop.trf.xlu0
        %v1167 = vpop.trf.xlu0
        %v1168 = vpop.trf.xlu0
        %v1169 = vpop.trf.xlu0
        %v1170 = vpop.trf.xlu0
        %v1171 = vpop.trf.xlu0
        %v1172 = vpop.trf.xlu0
        %v1173 = vpop.trf.xlu0
        %v1174 = vpop.trf.xlu0
        %v1175 = vpop.trf.xlu0
        %v1176 = vpop.trf.xlu0
        %1177 = vxpose.xlu0.b32.start [1/16] %v1107, 128
        %1178 = vxpose.xlu0.b32.cont [2/16] 0.0, 128
        %1179 = vxpose.xlu0.b32.cont [3/16] 0.0, 128
        %1180 = vxpose.xlu0.b32.cont [4/16] 0.0, 128
        %1181 = vxpose.xlu0.b32.cont [5/16] 0.0, 128
        %1182 = vxpose.xlu0.b32.cont [6/16] 0.0, 128
        %1183 = vxpose.xlu0.b32.cont [7/16] 0.0, 128
        %1184 = vxpose.xlu0.b32.cont [8/16] 0.0, 128
        %1185 = vxpose.xlu0.b32.cont [9/16] 0.0, 128
        %1186 = vxpose.xlu0.b32.cont [10/16] 0.0, 128
        %1187 = vxpose.xlu0.b32.cont [11/16] 0.0, 128
        %1188 = vxpose.xlu0.b32.cont [12/16] 0.0, 128
        %1189 = vxpose.xlu0.b32.cont [13/16] 0.0, 128
        %1190 = vxpose.xlu0.b32.cont [14/16] 0.0, 128
        %1191 = vxpose.xlu0.b32.cont [15/16] 0.0, 128
        %1192 = vxpose.xlu0.b32.end [16/16] 0.0, 128
        %v1193 = vpop.trf.xlu0
        %v1194 = vpop.trf.xlu0
        %v1195 = vpop.trf.xlu0
        %v1196 = vpop.trf.xlu0
        %v1197 = vpop.trf.xlu0
        %v1198 = vpop.trf.xlu0
        %v1199 = vpop.trf.xlu0
        %v1200 = vpop.trf.xlu0
        %v1201 = vpop.trf.xlu0
        %v1202 = vpop.trf.xlu0
        %v1203 = vpop.trf.xlu0
        %v1204 = vpop.trf.xlu0
        %v1205 = vpop.trf.xlu0
        %v1206 = vpop.trf.xlu0
        %v1207 = vpop.trf.xlu0
        %v1208 = vpop.trf.xlu0
        %1209 = vxpose.xlu0.b32.start [1/16] %v1108, 128
        %1210 = vxpose.xlu0.b32.cont [2/16] 0.0, 128
        %1211 = vxpose.xlu0.b32.cont [3/16] 0.0, 128
        %1212 = vxpose.xlu0.b32.cont [4/16] 0.0, 128
        %1213 = vxpose.xlu0.b32.cont [5/16] 0.0, 128
        %1214 = vxpose.xlu0.b32.cont [6/16] 0.0, 128
        %1215 = vxpose.xlu0.b32.cont [7/16] 0.0, 128
        %1216 = vxpose.xlu0.b32.cont [8/16] 0.0, 128
        %1217 = vxpose.xlu0.b32.cont [9/16] 0.0, 128
        %1218 = vxpose.xlu0.b32.cont [10/16] 0.0, 128
        %1219 = vxpose.xlu0.b32.cont [11/16] 0.0, 128
        %1220 = vxpose.xlu0.b32.cont [12/16] 0.0, 128
        %1221 = vxpose.xlu0.b32.cont [13/16] 0.0, 128
        %1222 = vxpose.xlu0.b32.cont [14/16] 0.0, 128
        %1223 = vxpose.xlu0.b32.cont [15/16] 0.0, 128
        %1224 = vxpose.xlu0.b32.end [16/16] 0.0, 128
        %v1225 = vpop.trf.xlu0
        %v1226 = vpop.trf.xlu0
        %v1227 = vpop.trf.xlu0
        %v1228 = vpop.trf.xlu0
        %v1229 = vpop.trf.xlu0
        %v1230 = vpop.trf.xlu0
        %v1231 = vpop.trf.xlu0
        %v1232 = vpop.trf.xlu0
        %v1233 = vpop.trf.xlu0
        %v1234 = vpop.trf.xlu0
        %v1235 = vpop.trf.xlu0
        %v1236 = vpop.trf.xlu0
        %v1237 = vpop.trf.xlu0
        %v1238 = vpop.trf.xlu0
        %v1239 = vpop.trf.xlu0
        %v1240 = vpop.trf.xlu0
        %1241 = vxpose.xlu0.b32.start [1/16] %v1109, 128
        %1242 = vxpose.xlu0.b32.cont [2/16] 0.0, 128
        %1243 = vxpose.xlu0.b32.cont [3/16] 0.0, 128
        %1244 = vxpose.xlu0.b32.cont [4/16] 0.0, 128
        %1245 = vxpose.xlu0.b32.cont [5/16] 0.0, 128
        %1246 = vxpose.xlu0.b32.cont [6/16] 0.0, 128
        %1247 = vxpose.xlu0.b32.cont [7/16] 0.0, 128
        %1248 = vxpose.xlu0.b32.cont [8/16] 0.0, 128
        %1249 = vxpose.xlu0.b32.cont [9/16] 0.0, 128
        %1250 = vxpose.xlu0.b32.cont [10/16] 0.0, 128
        %1251 = vxpose.xlu0.b32.cont [11/16] 0.0, 128
        %1252 = vxpose.xlu0.b32.cont [12/16] 0.0, 128
        %1253 = vxpose.xlu0.b32.cont [13/16] 0.0, 128
        %1254 = vxpose.xlu0.b32.cont [14/16] 0.0, 128
        %1255 = vxpose.xlu0.b32.cont [15/16] 0.0, 128
        %1256 = vxpose.xlu0.b32.end [16/16] 0.0, 128
        %v1257 = vpop.trf.xlu0
        %v1258 = vpop.trf.xlu0
        %v1259 = vpop.trf.xlu0
        %v1260 = vpop.trf.xlu0
        %v1261 = vpop.trf.xlu0
        %v1262 = vpop.trf.xlu0
        %v1263 = vpop.trf.xlu0
        %v1264 = vpop.trf.xlu0
        %v1265 = vpop.trf.xlu0
        %v1266 = vpop.trf.xlu0
        %v1267 = vpop.trf.xlu0
        %v1268 = vpop.trf.xlu0
        %v1269 = vpop.trf.xlu0
        %v1270 = vpop.trf.xlu0
        %v1271 = vpop.trf.xlu0
        %v1272 = vpop.trf.xlu0
        %1273 = vxpose.xlu0.b32.start [1/16] %v1110, 128
        %1274 = vxpose.xlu0.b32.cont [2/16] 0.0, 128
        %1275 = vxpose.xlu0.b32.cont [3/16] 0.0, 128
        %1276 = vxpose.xlu0.b32.cont [4/16] 0.0, 128
        %1277 = vxpose.xlu0.b32.cont [5/16] 0.0, 128
        %1278 = vxpose.xlu0.b32.cont [6/16] 0.0, 128
        %1279 = vxpose.xlu0.b32.cont [7/16] 0.0, 128
        %1280 = vxpose.xlu0.b32.cont [8/16] 0.0, 128
        %1281 = vxpose.xlu0.b32.cont [9/16] 0.0, 128
        %1282 = vxpose.xlu0.b32.cont [10/16] 0.0, 128
        %1283 = vxpose.xlu0.b32.cont [11/16] 0.0, 128
        %1284 = vxpose.xlu0.b32.cont [12/16] 0.0, 128
        %1285 = vxpose.xlu0.b32.cont [13/16] 0.0, 128
        %1286 = vxpose.xlu0.b32.cont [14/16] 0.0, 128
        %1287 = vxpose.xlu0.b32.cont [15/16] 0.0, 128
        %1288 = vxpose.xlu0.b32.end [16/16] 0.0, 128
        %v1289 = vpop.trf.xlu0
        %v1290 = vpop.trf.xlu0
        %v1291 = vpop.trf.xlu0
        %v1292 = vpop.trf.xlu0
        %v1293 = vpop.trf.xlu0
        %v1294 = vpop.trf.xlu0
        %v1295 = vpop.trf.xlu0
        %v1296 = vpop.trf.xlu0
        %v1297 = vpop.trf.xlu0
        %v1298 = vpop.trf.xlu0
        %v1299 = vpop.trf.xlu0
        %v1300 = vpop.trf.xlu0
        %v1301 = vpop.trf.xlu0
        %v1302 = vpop.trf.xlu0
        %v1303 = vpop.trf.xlu0
        %v1304 = vpop.trf.xlu0
        %1305 = vxpose.xlu0.b32.start [1/16] %v1111, 128
        %1306 = vxpose.xlu0.b32.cont [2/16] 0.0, 128
        %1307 = vxpose.xlu0.b32.cont [3/16] 0.0, 128
        %1308 = vxpose.xlu0.b32.cont [4/16] 0.0, 128
        %1309 = vxpose.xlu0.b32.cont [5/16] 0.0, 128
        %1310 = vxpose.xlu0.b32.cont [6/16] 0.0, 128
        %1311 = vxpose.xlu0.b32.cont [7/16] 0.0, 128
        %1312 = vxpose.xlu0.b32.cont [8/16] 0.0, 128
        %1313 = vxpose.xlu0.b32.cont [9/16] 0.0, 128
        %1314 = vxpose.xlu0.b32.cont [10/16] 0.0, 128
        %1315 = vxpose.xlu0.b32.cont [11/16] 0.0, 128
        %1316 = vxpose.xlu0.b32.cont [12/16] 0.0, 128
        %1317 = vxpose.xlu0.b32.cont [13/16] 0.0, 128
        %1318 = vxpose.xlu0.b32.cont [14/16] 0.0, 128
        %1319 = vxpose.xlu0.b32.cont [15/16] 0.0, 128
        %1320 = vxpose.xlu0.b32.end [16/16] 0.0, 128
        %v1321 = vpop.trf.xlu0
        %v1322 = vpop.trf.xlu0
        %v1323 = vpop.trf.xlu0
        %v1324 = vpop.trf.xlu0
        %v1325 = vpop.trf.xlu0
        %v1326 = vpop.trf.xlu0
        %v1327 = vpop.trf.xlu0
        %v1328 = vpop.trf.xlu0
        %v1329 = vpop.trf.xlu0
        %v1330 = vpop.trf.xlu0
        %v1331 = vpop.trf.xlu0
        %v1332 = vpop.trf.xlu0
        %v1333 = vpop.trf.xlu0
        %v1334 = vpop.trf.xlu0
        %v1335 = vpop.trf.xlu0
        %v1336 = vpop.trf.xlu0
        %1337 = vxpose.xlu0.b32.start [1/16] %v1112, 128
        %1338 = vxpose.xlu0.b32.cont [2/16] 0.0, 128
        %1339 = vxpose.xlu0.b32.cont [3/16] 0.0, 128
        %1340 = vxpose.xlu0.b32.cont [4/16] 0.0, 128
        %1341 = vxpose.xlu0.b32.cont [5/16] 0.0, 128
        %1342 = vxpose.xlu0.b32.cont [6/16] 0.0, 128
        %1343 = vxpose.xlu0.b32.cont [7/16] 0.0, 128
        %1344 = vxpose.xlu0.b32.cont [8/16] 0.0, 128
        %1345 = vxpose.xlu0.b32.cont [9/16] 0.0, 128
        %1346 = vxpose.xlu0.b32.cont [10/16] 0.0, 128
        %1347 = vxpose.xlu0.b32.cont [11/16] 0.0, 128
        %1348 = vxpose.xlu0.b32.cont [12/16] 0.0, 128
        %1349 = vxpose.xlu0.b32.cont [13/16] 0.0, 128
        %1350 = vxpose.xlu0.b32.cont [14/16] 0.0, 128
        %1351 = vxpose.xlu0.b32.cont [15/16] 0.0, 128
        %1352 = vxpose.xlu0.b32.end [16/16] 0.0, 128
        %v1353 = vpop.trf.xlu0
        %v1354 = vpop.trf.xlu0
        %v1355 = vpop.trf.xlu0
        %v1356 = vpop.trf.xlu0
        %v1357 = vpop.trf.xlu0
        %v1358 = vpop.trf.xlu0
        %v1359 = vpop.trf.xlu0
        %v1360 = vpop.trf.xlu0
        %v1361 = vpop.trf.xlu0
        %v1362 = vpop.trf.xlu0
        %v1363 = vpop.trf.xlu0
        %v1364 = vpop.trf.xlu0
        %v1365 = vpop.trf.xlu0
        %v1366 = vpop.trf.xlu0
        %v1367 = vpop.trf.xlu0
        %v1368 = vpop.trf.xlu0
        %v1369 = vpack.c.bf16 %v1130, %v1129
        %v1370 = vpack.c.bf16 %v1162, %v1161
        %v1371 = vpack.c.bf16 %v1194, %v1193
        %v1372 = vpack.c.bf16 %v1226, %v1225
        %v1373 = vpack.c.bf16 %v1258, %v1257
        %v1374 = vpack.c.bf16 %v1290, %v1289
        %v1375 = vpack.c.bf16 %v1322, %v1321
        %v1376 = vpack.c.bf16 %v1354, %v1353
        %v1377 = vld [vmem:[%s4] sm:$0x3]
        %vm1378 = vcmask 31744
        %v1380 = vsel %vm1378, %v1369, 0
        %v1383 = vsel %vm1378, %v1370, 0
        %v1386 = vsel %vm1378, %v1371, 0
        %v1389 = vsel %vm1378, %v1372, 0
        %v1392 = vsel %vm1378, %v1373, 0
        %v1395 = vsel %vm1378, %v1374, 0
        %v1398 = vsel %vm1378, %v1375, 0
        %v1401 = vsel %vm1378, %v1376, 0
        %vm1403 = vcmask 1041408
        %v1405 = vsel %vm1403, %v1377, 0
        %1407 = vmatprep.subr.bf16.mxu0 0
        %1408 = vmatpush1.bf16.msra.mxu0 0
        %1409 = vmatprep.subr.bf16.mxu0 0
        %1410 = vmatpush1.bf16.msra.mxu0 0
        %1411 = vmatprep.subr.bf16.mxu0 0
        %1412 = vmatpush1.bf16.msra.mxu0 0
        %1413 = vmatprep.subr.bf16.mxu0 0
        %1414 = vmatpush1.bf16.msra.mxu0 0
        %1415 = vmatprep.subr.bf16.mxu0 0
        %1416 = vmatpush1.bf16.msra.mxu0 0
        %1417 = vmatprep.subr.bf16.mxu0 0
        %1418 = vmatpush1.bf16.msra.mxu0 0
        %1419 = vmatprep.subr.bf16.mxu0 0
        %1420 = vmatpush1.bf16.msra.mxu0 0
        %1421 = vmatprep.subr.bf16.mxu0 0
        %1422 = vmatpush1.bf16.msra.mxu0 %v1405
        %1423 = vmatprep.subr.bf16.mxu0 0
        %1424 = vmatpush2.bf16.msra.mxu0 0
        %1425 = vmatprep.subr.bf16.mxu0 0
        %1426 = vmatpush2.bf16.msra.mxu0 0
        %1427 = vmatprep.subr.bf16.mxu0 0
        %1428 = vmatpush2.bf16.msra.mxu0 0
        %1429 = vmatprep.subr.bf16.mxu0 0
        %1430 = vmatpush2.bf16.msra.mxu0 0
        %1431 = vmatprep.subr.bf16.mxu0 0
        %1432 = vmatpush2.bf16.msra.mxu0 0
        %1433 = vmatprep.subr.bf16.mxu0 0
        %1434 = vmatpush2.bf16.msra.mxu0 0
        %1435 = vmatprep.subr.bf16.mxu0 0
        %1436 = vmatpush2.bf16.msra.mxu0 0
        %1437 = vmatprep.subr.bf16.mxu0 0
        %1438 = vmatpush2.bf16.msra.mxu0 0
        %1439 = vmatprep.mubr.bf16.mxu0 0
        %1440 = vmatmul.mubr.bf16.gmra.mxu0 %v1380
        %v1441 = vpop.f32.mrf.mxu0
        %v1442 = vadd.f32 0.0, %v1441
        %v1443 = vpop.f32.mrf.mxu0
        %v1444 = vpop.f32.mrf.mxu0
        %v1445 = vadd.f32 0.0, %v1444
        %v1446 = vpop.f32.mrf.mxu0
        %1447 = vmatprep.mubr.bf16.mxu0 0
        %1448 = vmatmul.mubr.bf16.gmra.mxu0 %v1383
        %v1449 = vpop.f32.mrf.mxu0
        %v1450 = vadd.f32 0.0, %v1449
        %v1451 = vpop.f32.mrf.mxu0
        %v1452 = vpop.f32.mrf.mxu0
        %v1453 = vadd.f32 0.0, %v1452
        %v1454 = vpop.f32.mrf.mxu0
        %1455 = vmatprep.mubr.bf16.mxu0 0
        %1456 = vmatmul.mubr.bf16.gmra.mxu0 %v1386
        %v1457 = vpop.f32.mrf.mxu0
        %v1458 = vadd.f32 0.0, %v1457
        %v1459 = vpop.f32.mrf.mxu0
        %v1460 = vpop.f32.mrf.mxu0
        %v1461 = vadd.f32 0.0, %v1460
        %v1462 = vpop.f32.mrf.mxu0
        %1463 = vmatprep.mubr.bf16.mxu0 0
        %1464 = vmatmul.mubr.bf16.gmra.mxu0 %v1389
        %v1465 = vpop.f32.mrf.mxu0
        %v1466 = vadd.f32 0.0, %v1465
        %v1467 = vpop.f32.mrf.mxu0
        %v1468 = vpop.f32.mrf.mxu0
        %v1469 = vadd.f32 0.0, %v1468
        %v1470 = vpop.f32.mrf.mxu0
        %1471 = vmatprep.mubr.bf16.mxu0 0
        %1472 = vmatmul.mubr.bf16.gmra.mxu0 %v1392
        %v1473 = vpop.f32.mrf.mxu0
        %v1474 = vadd.f32 0.0, %v1473
        %v1475 = vpop.f32.mrf.mxu0
        %v1476 = vpop.f32.mrf.mxu0
        %v1477 = vadd.f32 0.0, %v1476
        %v1478 = vpop.f32.mrf.mxu0
        %1479 = vmatprep.mubr.bf16.mxu0 0
        %1480 = vmatmul.mubr.bf16.gmra.mxu0 %v1395
        %v1481 = vpop.f32.mrf.mxu0
        %v1482 = vadd.f32 0.0, %v1481
        %v1483 = vpop.f32.mrf.mxu0
        %v1484 = vpop.f32.mrf.mxu0
        %v1485 = vadd.f32 0.0, %v1484
        %v1486 = vpop.f32.mrf.mxu0
        %1487 = vmatprep.mubr.bf16.mxu0 0
        %1488 = vmatmul.mubr.bf16.gmra.mxu0 %v1398
        %v1489 = vpop.f32.mrf.mxu0
        %v1490 = vadd.f32 0.0, %v1489
        %v1491 = vpop.f32.mrf.mxu0
        %v1492 = vpop.f32.mrf.mxu0
        %v1493 = vadd.f32 0.0, %v1492
        %v1494 = vpop.f32.mrf.mxu0
        %1495 = vmatprep.mubr.bf16.mxu0 0
        %1496 = vmatmul.mubr.bf16.gmra.mxu0 %v1401
        %v1497 = vpop.f32.mrf.mxu0
        %v1498 = vadd.f32 0.0, %v1497
        %v1499 = vpop.f32.mrf.mxu0
        %v1500 = vpop.f32.mrf.mxu0
        %v1501 = vadd.f32 0.0, %v1500
        %v1502 = vpop.f32.mrf.mxu0
        %1503 = vdwg.mxu0
        %v1504 = vpack.c.bf16 %v1445, %v1442
        %v1505 = vpack.c.bf16 %v1453, %v1450
        %v1506 = vpack.c.bf16 %v1461, %v1458
        %v1507 = vpack.c.bf16 %v1469, %v1466
        %v1508 = vpack.c.bf16 %v1477, %v1474
        %v1509 = vpack.c.bf16 %v1485, %v1482
        %v1510 = vpack.c.bf16 %v1493, %v1490
        %v1511 = vpack.c.bf16 %v1501, %v1498
        %v1520 = vunpack.c.l.b16 %v1504
        %v1521 = vunpack.c.h.b16 %v1504
        %v1522 = vunpack.c.l.b16 %v1505
        %v1523 = vunpack.c.h.b16 %v1505
        %v1524 = vunpack.c.l.b16 %v1506
        %v1525 = vunpack.c.h.b16 %v1506
        %v1526 = vunpack.c.l.b16 %v1507
        %v1527 = vunpack.c.h.b16 %v1507
        %v1528 = vunpack.c.l.b16 %v1508
        %v1529 = vunpack.c.h.b16 %v1508
        %v1530 = vunpack.c.l.b16 %v1509
        %v1531 = vunpack.c.h.b16 %v1509
        %v1532 = vunpack.c.l.b16 %v1510
        %v1533 = vunpack.c.h.b16 %v1510
        %v1534 = vunpack.c.l.b16 %v1511
        %v1535 = vunpack.c.h.b16 %v1511
        %v1536 = vpack.c.b16 %v1520, %v1520
        %v1537 = vpack.c.b16 %v1521, %v1521
        %v1538 = vpack.c.b16 %v1522, %v1522
        %v1539 = vpack.c.b16 %v1523, %v1523
        %v1540 = vpack.c.b16 %v1524, %v1524
        %v1541 = vpack.c.b16 %v1525, %v1525
        %v1542 = vpack.c.b16 %v1526, %v1526
        %v1543 = vpack.c.b16 %v1527, %v1527
        %v1544 = vpack.c.b16 %v1528, %v1528
        %v1545 = vpack.c.b16 %v1529, %v1529
        %v1546 = vpack.c.b16 %v1530, %v1530
        %v1547 = vpack.c.b16 %v1531, %v1531
        %v1548 = vpack.c.b16 %v1532, %v1532
        %v1549 = vpack.c.b16 %v1533, %v1533
        %v1550 = vpack.c.b16 %v1534, %v1534
        %v1551 = vpack.c.b16 %v1535, %v1535
        %v1568 = vmul.bf16 %v246, %v1536
        %v1569 = vmul.bf16 %v247, %v1537
        %v1570 = vmul.bf16 %v248, %v1538
        %v1571 = vmul.bf16 %v249, %v1539
        %v1572 = vmul.bf16 %v250, %v1540
        %v1573 = vmul.bf16 %v251, %v1541
        %v1574 = vmul.bf16 %v252, %v1542
        %v1575 = vmul.bf16 %v253, %v1543
        %v1576 = vmul.bf16 %v254, %v1544
        %v1577 = vmul.bf16 %v255, %v1545
        %v1578 = vmul.bf16 %v256, %v1546
        %v1579 = vmul.bf16 %v257, %v1547
        %v1580 = vmul.bf16 %v258, %v1548
        %v1581 = vmul.bf16 %v259, %v1549
        %v1582 = vmul.bf16 %v260, %v1550
        %v1583 = vmul.bf16 %v261, %v1551
        %v1584 = vunpack.c.l.bf16 %v1568
        %v1585 = vunpack.c.l.bf16 %v1569
        %v1586 = vunpack.c.l.bf16 %v1570
        %v1587 = vunpack.c.l.bf16 %v1571
        %v1588 = vunpack.c.l.bf16 %v1572
        %v1589 = vunpack.c.l.bf16 %v1573
        %v1590 = vunpack.c.l.bf16 %v1574
        %v1591 = vunpack.c.l.bf16 %v1575
        %v1592 = vunpack.c.l.bf16 %v1576
        %v1593 = vunpack.c.l.bf16 %v1577
        %v1594 = vunpack.c.l.bf16 %v1578
        %v1595 = vunpack.c.l.bf16 %v1579
        %v1596 = vunpack.c.l.bf16 %v1580
        %v1597 = vunpack.c.l.bf16 %v1581
        %v1598 = vunpack.c.l.bf16 %v1582
        %v1599 = vunpack.c.l.bf16 %v1583
        %v1600 = vsel %vm341, %v1584, 0.0
        %v1601 = vsel %vm341, %v1585, 0.0
        %v1602 = vadd.f32 %v1600, %v1601
        %v1603 = vrot.slane %v1602, 4
        %v1604 = vadd.f32 %v1602, %v1603
        %v1605 = vrot.slane %v1604, 2
        %v1606 = vadd.f32 %v1604, %v1605
        %v1607 = vrot.slane %v1606, 1
        %v1608 = vadd.f32 %v1606, %v1607
        %v1609 = vsel %vm341, %v1586, 0.0
        %v1610 = vsel %vm341, %v1587, 0.0
        %v1611 = vadd.f32 %v1609, %v1610
        %v1612 = vrot.slane %v1611, 4
        %v1613 = vadd.f32 %v1611, %v1612
        %v1614 = vrot.slane %v1613, 2
        %v1615 = vadd.f32 %v1613, %v1614
        %v1616 = vrot.slane %v1615, 1
        %v1617 = vadd.f32 %v1615, %v1616
        %v1618 = vsel %vm341, %v1588, 0.0
        %v1619 = vsel %vm341, %v1589, 0.0
        %v1620 = vadd.f32 %v1618, %v1619
        %v1621 = vrot.slane %v1620, 4
        %v1622 = vadd.f32 %v1620, %v1621
        %v1623 = vrot.slane %v1622, 2
        %v1624 = vadd.f32 %v1622, %v1623
        %v1625 = vrot.slane %v1624, 1
        %v1626 = vadd.f32 %v1624, %v1625
        %v1627 = vsel %vm341, %v1590, 0.0
        %v1628 = vsel %vm341, %v1591, 0.0
        %v1629 = vadd.f32 %v1627, %v1628
        %v1630 = vrot.slane %v1629, 4
        %v1631 = vadd.f32 %v1629, %v1630
        %v1632 = vrot.slane %v1631, 2
        %v1633 = vadd.f32 %v1631, %v1632
        %v1634 = vrot.slane %v1633, 1
        %v1635 = vadd.f32 %v1633, %v1634
        %v1636 = vsel %vm341, %v1592, 0.0
        %v1637 = vsel %vm341, %v1593, 0.0
        %v1638 = vadd.f32 %v1636, %v1637
        %v1639 = vrot.slane %v1638, 4
        %v1640 = vadd.f32 %v1638, %v1639
        %v1641 = vrot.slane %v1640, 2
        %v1642 = vadd.f32 %v1640, %v1641
        %v1643 = vrot.slane %v1642, 1
        %v1644 = vadd.f32 %v1642, %v1643
        %v1645 = vsel %vm341, %v1594, 0.0
        %v1646 = vsel %vm341, %v1595, 0.0
        %v1647 = vadd.f32 %v1645, %v1646
        %v1648 = vrot.slane %v1647, 4
        %v1649 = vadd.f32 %v1647, %v1648
        %v1650 = vrot.slane %v1649, 2
        %v1651 = vadd.f32 %v1649, %v1650
        %v1652 = vrot.slane %v1651, 1
        %v1653 = vadd.f32 %v1651, %v1652
        %v1654 = vsel %vm341, %v1596, 0.0
        %v1655 = vsel %vm341, %v1597, 0.0
        %v1656 = vadd.f32 %v1654, %v1655
        %v1657 = vrot.slane %v1656, 4
        %v1658 = vadd.f32 %v1656, %v1657
        %v1659 = vrot.slane %v1658, 2
        %v1660 = vadd.f32 %v1658, %v1659
        %v1661 = vrot.slane %v1660, 1
        %v1662 = vadd.f32 %v1660, %v1661
        %v1663 = vsel %vm341, %v1598, 0.0
        %v1664 = vsel %vm341, %v1599, 0.0
        %v1665 = vadd.f32 %v1663, %v1664
        %v1666 = vrot.slane %v1665, 4
        %v1667 = vadd.f32 %v1665, %v1666
        %v1668 = vrot.slane %v1667, 2
        %v1669 = vadd.f32 %v1667, %v1668
        %v1670 = vrot.slane %v1669, 1
        %v1671 = vadd.f32 %v1669, %v1670
        %vm1680 = vcmask 1041409
        %v1681 = vsel %vm1680, %v1617, %v1608
        %vm1682 = vcmask 1042434
        %v1683 = vsel %vm1682, %v1626, %v1681
        %vm1684 = vcmask 1043459
        %v1685 = vsel %vm1684, %v1635, %v1683
        %vm1686 = vcmask 1044484
        %v1687 = vsel %vm1686, %v1644, %v1685
        %vm1688 = vcmask 1045509
        %v1689 = vsel %vm1688, %v1653, %v1687
        %vm1690 = vcmask 1046534
        %v1691 = vsel %vm1690, %v1662, %v1689
        %vm1692 = vcmask 1047559
        %v1693 = vsel %vm1692, %v1671, %v1691
        %1695 = vst.msk [vmem:[%s243] sm:$0xff] %vm341, %v1693
        %s1696 = sand.u32 %s140, 1
        %s1697 = scalar_lea.sflag [#allocation4], %s1696
        %s1698 = sand.u32 %s140, 1
        %s1699 = smul.addr %s1698, 8
        %s1700 = scalar_lea.vmem [#allocation5], %s1699
        // Predicated region
        $region45: #{tpu_custom_call.1} parent=39 // pred_check
          %p1701 = pneg %p150
        $region46: #{tpu_custom_call.1} parent=39 // pred_check_branch
          %1703 = sbr.rel (%p1701) target = $region48
        $region47: #{tpu_custom_call.1} parent=39 // pred_region
          %s1705 = ssub.s32 128, 128
          %1706 = vsyncadd %s1697, %s1705
          %s1707 = smul.addr %s22, 128
          %s1708 = scalar_lea.hbm %s5, %s1707
          %s1710 = sshll.u32 %s1700, 4
          %s1711 = int_to_ptr.vmem [resolvable:$true] %s1710
          %1713 = dma.vmem_to_hbm [thread:$0]  %s1711, 128, %s1708, %s1697
        $region48: #{tpu_custom_call.1} parent=39 // pred_fallthru
          _
      $region40: #{tpu_custom_call.1} parent=5 // pred_fallthru
        _
      %p1714 = scmp.le.s32.totalorder 2, %s17
      // Predicated region
      $region49: #{tpu_custom_call.1} parent=5 // pred_check
        %p1715 = pneg %p1714
      $region50: #{tpu_custom_call.1} parent=5 // pred_check_branch
        %1717 = sbr.rel (%p1715) target = $region52
      $region51: #{tpu_custom_call.1} parent=5 // pred_region
        %s1718 = ssub.s32 %s17, 2
        // Predicated region
        $region53: #{tpu_custom_call.1} parent=51 // pred_check
          %p1719 = pneg %p156
        $region54: #{tpu_custom_call.1} parent=51 // pred_check_branch
          %1721 = sbr.rel (%p1719) target = $region56
        $region55: #{tpu_custom_call.1} parent=51 // pred_region
          %s1722 = sand.u32 %s141, 1
          %s1723 = scalar_lea.sflag [#allocation4], %s1722
          %s1724 = sand.u32 %s141, 1
          %s1725 = smul.addr %s1724, 8
          %s1726 = scalar_lea.vmem [#allocation5], %s1725
          %1727 = dma.done %s1723, 128
        $region56: #{tpu_custom_call.1} parent=51 // pred_fallthru
          _
      $region52: #{tpu_custom_call.1} parent=5 // pred_fallthru
        _
    $region6: #{tpu_custom_call.1} parent=1 // loop_footer
      %s21 = sadd.s32 1, %s17
    $region7: #{tpu_custom_call.1} parent=1 // loop_footer_branch
      %16 = sbr.rel target = $region3
    $region8: #{tpu_custom_call.1} parent=1 // loop_exit
      _
    %1728 = vsyncpa [#allocation3], 1
    %s1729 = scalar_lea.sflag [#allocation3], 1
    %1730 = vsyncpa %s1729, 1
    %1731 = vsyncpa [#allocation4], 1
    %s1732 = scalar_lea.sflag [#allocation4], 1
    %1733 = vsyncpa %s1732, 1

</llo_original>
